<compile_context>
chip_gen: v5e
topology: v5e:2x2
jax: 0.10.0
libtpu: 0.0.40
codegen_flags: <defaults>
</compile_context>

<pallas_src>
import jax
import jax.numpy as jnp
from jax.experimental import pallas as pl
from jax.experimental.pallas import tpu as pltpu

MIN_SCALE = 1e-6


def _softplus(x):
    # Numerically stable softplus: max(x,0) + log1p(exp(-|x|)).
    return jnp.maximum(x, 0.0) + jnp.log1p(jnp.exp(-jnp.abs(x)))


def _kl_std_normal(mu, scale):
    # KL( N(mu, scale) || N(0, 1) ) elementwise.
    return -jnp.log(scale) + 0.5 * (scale * scale + mu * mu - 1.0)


def bayesian_linear_kernel(x_ref, wmu_ref, wrho_ref, weps_ref,
                           bmu_ref, brho_ref, beps_ref,
                           y_ref, klp_ref, acc_ref):
    k = pl.program_id(1)
    nk = pl.num_programs(1)

    # --- sample this (TI, TO) weight tile via reparameterization (VPU/EUP) ---
    w_mu = wmu_ref[...]
    w_scale = _softplus(wrho_ref[...]) + MIN_SCALE
    w = w_mu + weps_ref[...] * w_scale

    # --- init resident accumulators for this out-feature tile ---
    @pl.when(k == 0)
    def _():
        acc_ref[...] = jnp.zeros_like(acc_ref)
        b_mu = bmu_ref[...]
        b_scale = _softplus(brho_ref[...]) + MIN_SCALE
        # bias KL, counted exactly once per out-feature tile
        klp_ref[...] = _kl_std_normal(b_mu, b_scale)

    # --- matmul on the MXU: pre-transposed layout, no in-kernel transpose ---
    acc_ref[...] += jnp.dot(x_ref[...], w, preferred_element_type=jnp.float32)

    # --- weight KL partials, reduced over the in-feature (sublane) axis only ---
    klp_ref[...] += jnp.sum(_kl_std_normal(w_mu, w_scale), axis=0, keepdims=True)

    # --- finalize: add the sampled bias and emit y ---
    @pl.when(k == nk - 1)
    def _():
        b_mu = bmu_ref[...]
        b_scale = _softplus(brho_ref[...]) + MIN_SCALE
        b = b_mu + beps_ref[...] * b_scale                # (1, TO)
        y_ref[...] = (acc_ref[...] + b).astype(y_ref.dtype)


def _pick_tile(dim, preferred):
    for t in preferred:
        if dim % t == 0:
            return t
    return dim  # tiny / odd layers degenerate to a whole-array block


def bayesian_linear_vi(x, w_mu, w_rho, b_mu, b_rho, key, *,
                       tile_o=None, tile_i=None):
    """Forward pass. Returns (y, kl_div)."""
    out_features, in_features = w_mu.shape
    batch = x.shape[0]

    if tile_o is None:
        tile_o = _pick_tile(out_features, (256, 128))   # 256-multiples feed v6e/v7x MXU fully
    if tile_i is None:
        tile_i = _pick_tile(in_features, (512, 256, 128))
    assert out_features % tile_o == 0 and in_features % tile_i == 0

    # Noise, mirroring torch.randn_like (kept outside so the kernel is bitwise-checkable).
    k_w, k_b = jax.random.split(key)
    eps_w = jax.random.normal(k_w, (out_features, in_features), dtype=jnp.float32)
    eps_b = jax.random.normal(k_b, (out_features,), dtype=jnp.float32)

    # One-time transposes in XLA so the kernel's matmul is x @ w directly.
    w_mu_t, w_rho_t, eps_w_t = w_mu.T, w_rho.T, eps_w.T

    # Bias-like vectors as (1, O) rows for lane-friendly VMEM tiles.
    b_mu2 = b_mu.reshape(1, out_features)
    b_rho2 = b_rho.reshape(1, out_features)
    eps_b2 = eps_b.reshape(1, out_features)

    grid = (out_features // tile_o, in_features // tile_i)

    x_spec = pl.BlockSpec((batch, tile_i), lambda o, k: (0, k))
    w_spec = pl.BlockSpec((tile_i, tile_o), lambda o, k: (k, o))
    b_spec = pl.BlockSpec((1, tile_o), lambda o, k: (0, o))
    y_spec = pl.BlockSpec((batch, tile_o), lambda o, k: (0, o))
    kl_spec = pl.BlockSpec((1, tile_o), lambda o, k: (0, o))

    # VMEM budget: 3 weight streams double-buffered + x + y/acc + bias tiles, with margin.
    vmem_bytes = 4 * (6 * tile_i * tile_o
                      + 2 * batch * tile_i
                      + 3 * batch * tile_o
                      + 12 * tile_o)
    vmem_limit = min(2 * vmem_bytes + (2 << 20), 60 << 20)  # stay under v7x's 64 MiB

    y, kl_part = pl.pallas_call(
        bayesian_linear_kernel,
        out_shape=(
            jax.ShapeDtypeStruct((batch, out_features), jnp.float32),
            jax.ShapeDtypeStruct((1, out_features), jnp.float32),
        ),
        grid_spec=pltpu.PrefetchScalarGridSpec(
            num_scalar_prefetch=0,
            grid=grid,
            in_specs=[x_spec, w_spec, w_spec, w_spec, b_spec, b_spec, b_spec],
            out_specs=(y_spec, kl_spec),
            scratch_shapes=[pltpu.VMEM((batch, tile_o), jnp.float32)],
        ),
        compiler_params=pltpu.CompilerParams(
            dimension_semantics=("parallel", "arbitrary"),
            vmem_limit_bytes=int(vmem_limit),
        ),
    )(x, w_mu_t, w_rho_t, eps_w_t, b_mu2, b_rho2, eps_b2)

    return y, jnp.sum(kl_part)


def _reference(x, w_mu, w_rho, b_mu, b_rho, key):
    """Pure-JAX reference for correctness check."""
    k_w, k_b = jax.random.split(key)
    eps_w = jax.random.normal(k_w, w_mu.shape, dtype=jnp.float32)
    eps_b = jax.random.normal(k_b, b_mu.shape, dtype=jnp.float32)
    w_scale = _softplus(w_rho) + MIN_SCALE
    b_scale = _softplus(b_rho) + MIN_SCALE
    w = w_mu + eps_w * w_scale
    b = b_mu + eps_b * b_scale
    kl = jnp.sum(_kl_std_normal(w_mu, w_scale)) + jnp.sum(_kl_std_normal(b_mu, b_scale))
    y = jnp.dot(x, w.T, preferred_element_type=jnp.float32,
                precision=jax.lax.Precision.HIGHEST) + b
    return y, kl


if __name__ == "__main__":
    key = jax.random.PRNGKey(0)
    k_x, k_wmu, k_wrho, k_bmu, k_brho, k_noise = jax.random.split(key, 6)

    batch, in_features, out_features = 16, 512, 256

    x = jax.random.normal(k_x, (batch, in_features), dtype=jnp.float32)
    # Parameters ~ N(0, 0.1), matching torch .normal_(0, 0.1) init.
    w_mu = 0.1 * jax.random.normal(k_wmu, (out_features, in_features), dtype=jnp.float32)
    w_rho = 0.1 * jax.random.normal(k_wrho, (out_features, in_features), dtype=jnp.float32)
    b_mu = 0.1 * jax.random.normal(k_bmu, (out_features,), dtype=jnp.float32)
    b_rho = 0.1 * jax.random.normal(k_brho, (out_features,), dtype=jnp.float32)

    # Force a (2, 2) grid at these small demo shapes so the tiled / accumulating
    # paths (pl.when init + finalize, resident output blocks) are exercised.
    y, kl = bayesian_linear_vi(x, w_mu, w_rho, b_mu, b_rho, k_noise,
                               tile_o=128, tile_i=256)
    y = jax.block_until_ready(y)
    kl = jax.block_until_ready(kl)

    y_ref, kl_ref = _reference(x, w_mu, w_rho, b_mu, b_rho, k_noise)
    assert jnp.allclose(y, y_ref, atol=5e-2, rtol=1e-3), "output mismatch"
    assert jnp.allclose(kl, kl_ref, atol=1e-1, rtol=1e-3), "kl mismatch"

    print("KERNEL_OK")
</pallas_src>

<mosaic_0001>
module attributes {stable_mosaic.version = 11 : i64} {
  func.func @bayesian_linear_kernel(%arg0: i32, %arg1: i32, %arg2: memref<16x256xf32, #tpu.memory_space<vmem>>, %arg3: memref<256x128xf32, #tpu.memory_space<vmem>>, %arg4: memref<256x128xf32, #tpu.memory_space<vmem>>, %arg5: memref<256x128xf32, #tpu.memory_space<vmem>>, %arg6: memref<1x128xf32, #tpu.memory_space<vmem>>, %arg7: memref<1x128xf32, #tpu.memory_space<vmem>>, %arg8: memref<1x128xf32, #tpu.memory_space<vmem>>, %arg9: memref<16x128xf32, #tpu.memory_space<vmem>>, %arg10: memref<1x128xf32, #tpu.memory_space<vmem>>, %arg11: memref<16x128xf32, #tpu.memory_space<vmem>>) attributes {dimension_semantics = [#tpu.dimension_semantics<parallel>, #tpu.dimension_semantics<arbitrary>], iteration_bounds = array<i64: 2, 2>, scalar_prefetch = 0 : i64, scratch_operands = 1 : i64, tpu.core_type = #tpu.core_type<tc>, window_params = [{transform_indices = @transform_0, window_bounds = array<i64: 16, 256>}, {transform_indices = @transform_1, window_bounds = array<i64: 256, 128>}, {transform_indices = @transform_2, window_bounds = array<i64: 256, 128>}, {transform_indices = @transform_3, window_bounds = array<i64: 256, 128>}, {transform_indices = @transform_4, window_bounds = array<i64: 1, 128>}, {transform_indices = @transform_5, window_bounds = array<i64: 1, 128>}, {transform_indices = @transform_6, window_bounds = array<i64: 1, 128>}, {transform_indices = @transform_7, window_bounds = array<i64: 16, 128>}, {transform_indices = @transform_8, window_bounds = array<i64: 1, 128>}]} {
    %c0 = arith.constant 0 : index
    %c0_0 = arith.constant 0 : index
    %0 = vector.load %arg3[%c0, %c0_0] : memref<256x128xf32, #tpu.memory_space<vmem>>, vector<256x128xf32>
    %c0_1 = arith.constant 0 : index
    %c0_2 = arith.constant 0 : index
    %1 = vector.load %arg4[%c0_1, %c0_2] : memref<256x128xf32, #tpu.memory_space<vmem>>, vector<256x128xf32>
    %cst = arith.constant 0.000000e+00 : f32
    %2 = vector.broadcast %cst : f32 to vector<256x128xf32>
    %3 = arith.maximumf %1, %2 : vector<256x128xf32>
    %4 = math.absf %1 : vector<256x128xf32>
    %cst_3 = arith.constant 0.000000e+00 : f32
    %5 = vector.broadcast %cst_3 : f32 to vector<256x128xf32>
    %6 = arith.subf %5, %4 : vector<256x128xf32>
    %7 = math.exp %6 : vector<256x128xf32>
    %8 = math.log1p %7 : vector<256x128xf32>
    %9 = arith.addf %3, %8 : vector<256x128xf32>
    %cst_4 = arith.constant 9.99999997E-7 : f32
    %10 = vector.broadcast %cst_4 : f32 to vector<256x128xf32>
    %11 = arith.addf %9, %10 : vector<256x128xf32>
    %c0_5 = arith.constant 0 : index
    %c0_6 = arith.constant 0 : index
    %12 = vector.load %arg5[%c0_5, %c0_6] : memref<256x128xf32, #tpu.memory_space<vmem>>, vector<256x128xf32>
    %13 = arith.mulf %12, %11 : vector<256x128xf32>
    %14 = arith.addf %0, %13 : vector<256x128xf32>
    %c0_i32 = arith.constant 0 : i32
    %15 = arith.cmpi eq, %arg1, %c0_i32 : i32
    %16 = arith.extui %15 : i1 to i32
    %c0_i32_7 = arith.constant 0 : i32
    %17 = arith.cmpi ne, %16, %c0_i32_7 : i32
    scf.if %17 {
      %cst_24 = arith.constant 0.000000e+00 : f32
      %42 = vector.broadcast %cst_24 : f32 to vector<16x128xf32>
      %c0_25 = arith.constant 0 : index
      %c0_26 = arith.constant 0 : index
      %43 = vector.load %arg11[%c0_25, %c0_26] : memref<16x128xf32, #tpu.memory_space<vmem>>, vector<16x128xf32>
      tpu.vector_store %arg11[%c0_25, %c0_26], %42 {strides = array<i32>} : memref<16x128xf32, #tpu.memory_space<vmem>>, vector<16x128xf32>,
      %c0_27 = arith.constant 0 : index
      %c0_28 = arith.constant 0 : index
      %44 = vector.load %arg6[%c0_27, %c0_28] : memref<1x128xf32, #tpu.memory_space<vmem>>, vector<1x128xf32>
      %c0_29 = arith.constant 0 : index
      %c0_30 = arith.constant 0 : index
      %45 = vector.load %arg7[%c0_29, %c0_30] : memref<1x128xf32, #tpu.memory_space<vmem>>, vector<1x128xf32>
      %cst_31 = arith.constant 0.000000e+00 : f32
      %46 = vector.broadcast %cst_31 : f32 to vector<1x128xf32>
      %47 = arith.maximumf %45, %46 : vector<1x128xf32>
      %48 = math.absf %45 : vector<1x128xf32>
      %cst_32 = arith.constant 0.000000e+00 : f32
      %49 = vector.broadcast %cst_32 : f32 to vector<1x128xf32>
      %50 = arith.subf %49, %48 : vector<1x128xf32>
      %51 = math.exp %50 : vector<1x128xf32>
      %52 = math.log1p %51 : vector<1x128xf32>
      %53 = arith.addf %47, %52 : vector<1x128xf32>
      %cst_33 = arith.constant 9.99999997E-7 : f32
      %54 = vector.broadcast %cst_33 : f32 to vector<1x128xf32>
      %55 = arith.addf %53, %54 : vector<1x128xf32>
      %56 = math.log %55 : vector<1x128xf32>
      %cst_34 = arith.constant 0.000000e+00 : f32
      %57 = vector.broadcast %cst_34 : f32 to vector<1x128xf32>
      %58 = arith.subf %57, %56 : vector<1x128xf32>
      %59 = arith.mulf %55, %55 : vector<1x128xf32>
      %60 = arith.mulf %44, %44 : vector<1x128xf32>
      %61 = arith.addf %59, %60 : vector<1x128xf32>
      %cst_35 = arith.constant 1.000000e+00 : f32
      %62 = vector.broadcast %cst_35 : f32 to vector<1x128xf32>
      %63 = arith.subf %61, %62 : vector<1x128xf32>
      %cst_36 = arith.constant 5.000000e-01 : f32
      %64 = vector.broadcast %cst_36 : f32 to vector<1x128xf32>
      %65 = arith.mulf %64, %63 : vector<1x128xf32>
      %66 = arith.addf %58, %65 : vector<1x128xf32>
      %c0_37 = arith.constant 0 : index
      %c0_38 = arith.constant 0 : index
      %67 = vector.load %arg10[%c0_37, %c0_38] : memref<1x128xf32, #tpu.memory_space<vmem>>, vector<1x128xf32>
      tpu.vector_store %arg10[%c0_37, %c0_38], %66 {strides = array<i32>} : memref<1x128xf32, #tpu.memory_space<vmem>>, vector<1x128xf32>,
    } else {
    }
    %c0_8 = arith.constant 0 : index
    %c0_9 = arith.constant 0 : index
    %18 = vector.load %arg11[%c0_8, %c0_9] : memref<16x128xf32, #tpu.memory_space<vmem>>, vector<16x128xf32>
    %c0_10 = arith.constant 0 : index
    %c0_11 = arith.constant 0 : index
    %19 = vector.load %arg2[%c0_10, %c0_11] : memref<16x256xf32, #tpu.memory_space<vmem>>, vector<16x256xf32>
    %cst_12 = arith.constant dense<0.000000e+00> : vector<16x128xf32>
    %20 = tpu.matmul %19, %14, %cst_12 {dimension_numbers = #tpu.dot_dimension_numbers<[1], [0], [0], [1], [0, 0, 1, 1], [], []>} : vector<16x256xf32>, vector<256x128xf32>, vector<16x128xf32> -> vector<16x128xf32>
    %21 = arith.addf %18, %20 : vector<16x128xf32>
    %c0_13 = arith.constant 0 : index
    %c0_14 = arith.constant 0 : index
    %22 = vector.load %arg11[%c0_13, %c0_14] : memref<16x128xf32, #tpu.memory_space<vmem>>, vector<16x128xf32>
    tpu.vector_store %arg11[%c0_13, %c0_14], %21 {strides = array<i32>} : memref<16x128xf32, #tpu.memory_space<vmem>>, vector<16x128xf32>,
    %c0_15 = arith.constant 0 : index
    %c0_16 = arith.constant 0 : index
    %23 = vector.load %arg10[%c0_15, %c0_16] : memref<1x128xf32, #tpu.memory_space<vmem>>, vector<1x128xf32>
    %24 = math.log %11 : vector<256x128xf32>
    %cst_17 = arith.constant 0.000000e+00 : f32
    %25 = vector.broadcast %cst_17 : f32 to vector<256x128xf32>
    %26 = arith.subf %25, %24 : vector<256x128xf32>
    %27 = arith.mulf %11, %11 : vector<256x128xf32>
    %28 = arith.mulf %0, %0 : vector<256x128xf32>
    %29 = arith.addf %27, %28 : vector<256x128xf32>
    %cst_18 = arith.constant 1.000000e+00 : f32
    %30 = vector.broadcast %cst_18 : f32 to vector<256x128xf32>
    %31 = arith.subf %29, %30 : vector<256x128xf32>
    %cst_19 = arith.constant 5.000000e-01 : f32
    %32 = vector.broadcast %cst_19 : f32 to vector<256x128xf32>
    %33 = arith.mulf %32, %31 : vector<256x128xf32>
    %34 = arith.addf %26, %33 : vector<256x128xf32>
    %cst_20 = arith.constant dense<0.000000e+00> : vector<128xf32>
    %35 = vector.multi_reduction <add>, %34, %cst_20 [0] : vector<256x128xf32> to vector<128xf32>
    %36 = vector.shape_cast %35 : vector<128xf32> to vector<1x128xf32>
    %37 = arith.addf %23, %36 : vector<1x128xf32>
    %c0_21 = arith.constant 0 : index
    %c0_22 = arith.constant 0 : index
    %38 = vector.load %arg10[%c0_21, %c0_22] : memref<1x128xf32, #tpu.memory_space<vmem>>, vector<1x128xf32>
    tpu.vector_store %arg10[%c0_21, %c0_22], %37 {strides = array<i32>} : memref<1x128xf32, #tpu.memory_space<vmem>>, vector<1x128xf32>,
    %c1_i32 = arith.constant 1 : i32
    %39 = arith.cmpi eq, %arg1, %c1_i32 : i32
    %40 = arith.extui %39 : i1 to i32
    %c0_i32_23 = arith.constant 0 : i32
    %41 = arith.cmpi ne, %40, %c0_i32_23 : i32
    scf.if %41 {
      %c0_24 = arith.constant 0 : index
      %c0_25 = arith.constant 0 : index
      %42 = vector.load %arg6[%c0_24, %c0_25] : memref<1x128xf32, #tpu.memory_space<vmem>>, vector<1x128xf32>
      %c0_26 = arith.constant 0 : index
      %c0_27 = arith.constant 0 : index
      %43 = vector.load %arg7[%c0_26, %c0_27] : memref<1x128xf32, #tpu.memory_space<vmem>>, vector<1x128xf32>
      %cst_28 = arith.constant 0.000000e+00 : f32
      %44 = vector.broadcast %cst_28 : f32 to vector<1x128xf32>
      %45 = arith.maximumf %43, %44 : vector<1x128xf32>
      %46 = math.absf %43 : vector<1x128xf32>
      %cst_29 = arith.constant 0.000000e+00 : f32
      %47 = vector.broadcast %cst_29 : f32 to vector<1x128xf32>
      %48 = arith.subf %47, %46 : vector<1x128xf32>
      %49 = math.exp %48 : vector<1x128xf32>
      %50 = math.log1p %49 : vector<1x128xf32>
      %51 = arith.addf %45, %50 : vector<1x128xf32>
      %cst_30 = arith.constant 9.99999997E-7 : f32
      %52 = vector.broadcast %cst_30 : f32 to vector<1x128xf32>
      %53 = arith.addf %51, %52 : vector<1x128xf32>
      %c0_31 = arith.constant 0 : index
      %c0_32 = arith.constant 0 : index
      %54 = vector.load %arg8[%c0_31, %c0_32] : memref<1x128xf32, #tpu.memory_space<vmem>>, vector<1x128xf32>
      %55 = arith.mulf %54, %53 : vector<1x128xf32>
      %56 = arith.addf %42, %55 : vector<1x128xf32>
      %c0_33 = arith.constant 0 : index
      %c0_34 = arith.constant 0 : index
      %57 = vector.load %arg11[%c0_33, %c0_34] : memref<16x128xf32, #tpu.memory_space<vmem>>, vector<16x128xf32>
      %58 = vector.broadcast %56 : vector<1x128xf32> to vector<16x128xf32>
      %59 = arith.addf %57, %58 : vector<16x128xf32>
      %c0_35 = arith.constant 0 : index
      %c0_36 = arith.constant 0 : index
      %60 = vector.load %arg9[%c0_35, %c0_36] : memref<16x128xf32, #tpu.memory_space<vmem>>, vector<16x128xf32>
      tpu.vector_store %arg9[%c0_35, %c0_36], %59 {strides = array<i32>} : memref<16x128xf32, #tpu.memory_space<vmem>>, vector<16x128xf32>,
    } else {
    }
    return
  }
  func.func @transform_0(%arg0: i32, %arg1: i32) -> (i32, i32) {
    %c0_i32 = arith.constant 0 : i32
    %c0_i32_0 = arith.constant 0 : i32
    return %c0_i32, %arg1 : i32, i32
  }
  func.func @transform_1(%arg0: i32, %arg1: i32) -> (i32, i32) {
    %c0_i32 = arith.constant 0 : i32
    return %arg1, %arg0 : i32, i32
  }
  func.func @transform_2(%arg0: i32, %arg1: i32) -> (i32, i32) {
    %c0_i32 = arith.constant 0 : i32
    return %arg1, %arg0 : i32, i32
  }
  func.func @transform_3(%arg0: i32, %arg1: i32) -> (i32, i32) {
    %c0_i32 = arith.constant 0 : i32
    return %arg1, %arg0 : i32, i32
  }
  func.func @transform_4(%arg0: i32, %arg1: i32) -> (i32, i32) {
    %c0_i32 = arith.constant 0 : i32
    %c0_i32_0 = arith.constant 0 : i32
    return %c0_i32, %arg0 : i32, i32
  }
  func.func @transform_5(%arg0: i32, %arg1: i32) -> (i32, i32) {
    %c0_i32 = arith.constant 0 : i32
    %c0_i32_0 = arith.constant 0 : i32
    return %c0_i32, %arg0 : i32, i32
  }
  func.func @transform_6(%arg0: i32, %arg1: i32) -> (i32, i32) {
    %c0_i32 = arith.constant 0 : i32
    %c0_i32_0 = arith.constant 0 : i32
    return %c0_i32, %arg0 : i32, i32
  }
  func.func @transform_7(%arg0: i32, %arg1: i32) -> (i32, i32) {
    %c0_i32 = arith.constant 0 : i32
    %c0_i32_0 = arith.constant 0 : i32
    return %c0_i32, %arg0 : i32, i32
  }
  func.func @transform_8(%arg0: i32, %arg1: i32) -> (i32, i32) {
    %c0_i32 = arith.constant 0 : i32
    %c0_i32_0 = arith.constant 0 : i32
    return %c0_i32, %arg0 : i32, i32
  }
}

</mosaic_0001>

<llo_original>
// kernel: tpu_custom_call.1
$region0: #{tpu_custom_call.1}
  #allocation0 [shape = 'u32[]', space=smem, size = 0x4, offset = 0x4, fixed_abs, tag = 'smem constant byte address 0x4 - core index']
  #allocation1 [shape = 'u32[72,128]{1,0:T(1,128)}', space=vmem, size = 0x9000, scoped, tag = 'internal scratch']
  #allocation2 [shape = 'f32[16,128]{1,0:T(8,128)}', space=vmem, size = 0x2000, scoped, tag = 'scratch operand']
  %s0 = inlined_call_operand.hbm [shape: f32[16,512], index: 0, kind: input, shape index: {}]
  %s1 = inlined_call_operand.hbm [shape: f32[512,256], index: 1, kind: input, shape index: {}]
  %s2 = inlined_call_operand.hbm [shape: f32[512,256], index: 2, kind: input, shape index: {}]
  %s3 = inlined_call_operand.hbm [shape: f32[512,256], index: 3, kind: input, shape index: {}]
  %s4 = inlined_call_operand.vmem [shape: f32[1,256], index: 4, kind: input, shape index: {}]
  %s5 = inlined_call_operand.vmem [shape: f32[1,256], index: 5, kind: input, shape index: {}]
  %s6 = inlined_call_operand.hbm [shape: f32[1,256], index: 6, kind: input, shape index: {}]
  %s7 = inlined_call_operand.hbm [shape: f32[16,256], index: 7, kind: output, shape index: {0}]
  %s8 = inlined_call_operand.hbm [shape: f32[1,256], index: 8, kind: output, shape index: {1}]
  %9 = xla_tuple %s7, %s8
  %s10 = sld [smem:[#allocation0]]
  $region97: #{tpu_custom_call.1} parent=0
    _
  %s12 = ssub.s32 1, %s10
  %s13 = scalar_select 0, %s12, %s10
  $region1: #{tpu_custom_call.1} parent=0
    #allocation3 [shape = 'u8[32768]{0}', space=vmem, size = 0x8000, scoped, tag = 'input window, operand 0']
    #allocation4 [shape = 's32[2]{0}', space=sflag, size = 0x8, scoped, tag = 'scoped memory for tpu_custom_call.1']
    #allocation5 [shape = 's32[2]{0}', space=sflag, size = 0x8, scoped, tag = 'scoped memory for tpu_custom_call.1']
    #allocation6 [shape = 'u8[262144]{0}', space=vmem, size = 0x40000, scoped, tag = 'input window, operand 1']
    #allocation7 [shape = 's32[2]{0}', space=sflag, size = 0x8, scoped, tag = 'scoped memory for tpu_custom_call.1']
    #allocation8 [shape = 'u8[262144]{0}', space=vmem, size = 0x40000, scoped, tag = 'input window, operand 2']
    #allocation9 [shape = 'u8[262144]{0}', space=vmem, size = 0x40000, scoped, tag = 'input window, operand 3']
    #allocation10 [shape = 's32[2]{0}', space=sflag, size = 0x8, scoped, tag = 'scoped memory for tpu_custom_call.1']
    #allocation11 [shape = 'u8[1024]{0}', space=vmem, size = 0x400, scoped, tag = 'input window, operand 6']
    #allocation12 [shape = 'u8[16384]{0}', space=vmem, size = 0x4000, scoped, tag = 'output window, operand 0']
    #allocation13 [shape = 'u8[1024]{0}', space=vmem, size = 0x400, scoped, tag = 'output window, operand 1']
    #allocation14 [shape = 's32[2]{0}', space=sflag, size = 0x8, scoped, tag = 'scoped memory for tpu_custom_call.1']
    %14 = vsyncpa [#allocation4], 0
    %s15 = scalar_lea.sflag [#allocation4], 1
    %16 = vsyncpa %s15, 0
    %17 = vsyncpa [#allocation7], 0
    %s18 = scalar_lea.sflag [#allocation7], 1
    %19 = vsyncpa %s18, 0
    %20 = vsyncpa [#allocation10], 0
    %s21 = scalar_lea.sflag [#allocation10], 1
    %22 = vsyncpa %s21, 0
    %23 = vsyncpa [#allocation5], 0
    %s24 = scalar_lea.sflag [#allocation5], 1
    %25 = vsyncpa %s24, 0
    %26 = vsyncpa [#allocation14], 0
    %s27 = scalar_lea.sflag [#allocation14], 1
    %28 = vsyncpa %s27, 0
    loop: start=0, step=1, limit=6
    $region2: #{tpu_custom_call.1} parent=1 // loop_pre_header
      _
    $region3: #{tpu_custom_call.1} parent=1 // loop_header
      %s30 = sphi 0, %s34
      %p31 = scmp.ge.s32.totalorder %s30, 6
      %s37 = sphi 0, %s49
      %s38 = sphi 0, %s45
      %s39 = sphi 0, %s37
      %s40 = sphi 0, %s38
      %s41 = sphi 0, %s39
      %s42 = sphi 0, %s40
      %s52 = sphi 0, %s54
      %s55 = sphi 0, %s52
      %s56 = sphi 0, %s55
      %s72 = sphi 0, %s56
      %s80 = sphi 0, %s82
      %s83 = sphi 0, %s80
      %s84 = sphi 0, %s83
      %s100 = sphi 0, %s84
      %s108 = sphi 0, %s110
      %s111 = sphi 0, %s108
      %s112 = sphi 0, %s111
      %s128 = sphi 0, %s112
      %s136 = sphi 0, %s138
      %s139 = sphi 0, %s136
      %s140 = sphi 0, %s139
      %s156 = sphi 0, %s140
      %s162 = sphi 0, %s164
      %s165 = sphi 0, %s162
      %s166 = sphi 0, %s165
      %s182 = sphi 0, %s166
      %s188 = sphi 0, %s190
      %s191 = sphi 0, %s188
      %s192 = sphi 0, %s191
      %s208 = sphi 0, %s192
      %s214 = sphi 0, %s216
      %s217 = sphi 0, %s214
      %s218 = sphi 0, %s217
      %s234 = sphi 0, %s218
      %s240 = sphi 0, %s242
      %s243 = sphi 0, %s240
      %s244 = sphi 0, %s243
      %s260 = sphi 0, %s244
      %s266 = sphi 0, %s268
      %s269 = sphi 0, %s266
      %s270 = sphi 0, %s269
      %s286 = sphi 0, %s270
    $region4: #{tpu_custom_call.1} parent=1 // loop_header_branch
      %33 = sbr.rel (%p31) target = $region8
    $region5: #{tpu_custom_call.1} parent=1 // loop_body
      %s35 = ssub.s32 %s30, 1
      %s36 = ssub.s32 %s30, 2
      %s43 = sadd.s32 1, %s38
      %p44 = scmp.ge.s32.totalorder %s43, 2
      %s45 = scalar_select %p44, 0, %s43
      %s46 = sadd.s32 1, %s37
      %s47 = scalar_select %p44, %s46, %s37
      %p48 = scmp.ge.s32.totalorder %s47, 2
      %s49 = scalar_select %p48, 0, %s47
      %s50 = ssub.s32 %s38, %s45
      %p51 = scmp.eq.s32.totalorder %s50, 0
      %s53 = sadd.s32 %s52, 1
      %s54 = scalar_select %p51, %s52, %s53
      %p57 = pneg %p51
      %p58 = scmp.eq.s32.totalorder %s30, 3
      %p59 = por %p57, %p58
      %p60 = scmp.ne.s32.totalorder %s52, %s55
      %p61 = scmp.eq.s32.totalorder %s30, 0
      %p62 = por %p60, %p61
      %p63 = scmp.ne.s32.totalorder %s52, %s55
      %p64 = scmp.eq.s32.totalorder %s35, 3
      %p65 = por %p63, %p64
      %p66 = scmp.ne.s32.totalorder %s55, %s56
      %p67 = scmp.eq.s32.totalorder %s35, 0
      %p68 = por %p66, %p67
      %p69 = scmp.ne.s32.totalorder %s55, %s56
      %p70 = scmp.eq.s32.totalorder %s36, 3
      %p71 = por %p69, %p70
      %p73 = scmp.ne.s32.totalorder %s56, %s72
      %p74 = scmp.eq.s32.totalorder %s36, 0
      %p75 = por %p73, %p74
      %s76 = ssub.s32 %s38, %s45
      %s77 = ssub.s32 %s37, %s49
      %s78 = sor.u32 %s76, %s77
      %p79 = scmp.eq.s32.totalorder %s78, 0
      %s81 = sadd.s32 %s80, 1
      %s82 = scalar_select %p79, %s80, %s81
      %p85 = pneg %p79
      %p86 = scmp.eq.s32.totalorder %s30, 3
      %p87 = por %p85, %p86
      %p88 = scmp.ne.s32.totalorder %s80, %s83
      %p89 = scmp.eq.s32.totalorder %s30, 0
      %p90 = por %p88, %p89
      %p91 = scmp.ne.s32.totalorder %s80, %s83
      %p92 = scmp.eq.s32.totalorder %s35, 3
      %p93 = por %p91, %p92
      %p94 = scmp.ne.s32.totalorder %s83, %s84
      %p95 = scmp.eq.s32.totalorder %s35, 0
      %p96 = por %p94, %p95
      %p97 = scmp.ne.s32.totalorder %s83, %s84
      %p98 = scmp.eq.s32.totalorder %s36, 3
      %p99 = por %p97, %p98
      %p101 = scmp.ne.s32.totalorder %s84, %s100
      %p102 = scmp.eq.s32.totalorder %s36, 0
      %p103 = por %p101, %p102
      %s104 = ssub.s32 %s38, %s45
      %s105 = ssub.s32 %s37, %s49
      %s106 = sor.u32 %s104, %s105
      %p107 = scmp.eq.s32.totalorder %s106, 0
      %s109 = sadd.s32 %s108, 1
      %s110 = scalar_select %p107, %s108, %s109
      %p113 = pneg %p107
      %p114 = scmp.eq.s32.totalorder %s30, 3
      %p115 = por %p113, %p114
      %p116 = scmp.ne.s32.totalorder %s108, %s111
      %p117 = scmp.eq.s32.totalorder %s30, 0
      %p118 = por %p116, %p117
      %p119 = scmp.ne.s32.totalorder %s108, %s111
      %p120 = scmp.eq.s32.totalorder %s35, 3
      %p121 = por %p119, %p120
      %p122 = scmp.ne.s32.totalorder %s111, %s112
      %p123 = scmp.eq.s32.totalorder %s35, 0
      %p124 = por %p122, %p123
      %p125 = scmp.ne.s32.totalorder %s111, %s112
      %p126 = scmp.eq.s32.totalorder %s36, 3
      %p127 = por %p125, %p126
      %p129 = scmp.ne.s32.totalorder %s112, %s128
      %p130 = scmp.eq.s32.totalorder %s36, 0
      %p131 = por %p129, %p130
      %s132 = ssub.s32 %s38, %s45
      %s133 = ssub.s32 %s37, %s49
      %s134 = sor.u32 %s132, %s133
      %p135 = scmp.eq.s32.totalorder %s134, 0
      %s137 = sadd.s32 %s136, 1
      %s138 = scalar_select %p135, %s136, %s137
      %p141 = pneg %p135
      %p142 = scmp.eq.s32.totalorder %s30, 3
      %p143 = por %p141, %p142
      %p144 = scmp.ne.s32.totalorder %s136, %s139
      %p145 = scmp.eq.s32.totalorder %s30, 0
      %p146 = por %p144, %p145
      %p147 = scmp.ne.s32.totalorder %s136, %s139
      %p148 = scmp.eq.s32.totalorder %s35, 3
      %p149 = por %p147, %p148
      %p150 = scmp.ne.s32.totalorder %s139, %s140
      %p151 = scmp.eq.s32.totalorder %s35, 0
      %p152 = por %p150, %p151
      %p153 = scmp.ne.s32.totalorder %s139, %s140
      %p154 = scmp.eq.s32.totalorder %s36, 3
      %p155 = por %p153, %p154
      %p157 = scmp.ne.s32.totalorder %s140, %s156
      %p158 = scmp.eq.s32.totalorder %s36, 0
      %p159 = por %p157, %p158
      %s160 = ssub.s32 %s37, %s49
      %p161 = scmp.eq.s32.totalorder %s160, 0
      %s163 = sadd.s32 %s162, 1
      %s164 = scalar_select %p161, %s162, %s163
      %p167 = pneg %p161
      %p168 = scmp.eq.s32.totalorder %s30, 3
      %p169 = por %p167, %p168
      %p170 = scmp.ne.s32.totalorder %s162, %s165
      %p171 = scmp.eq.s32.totalorder %s30, 0
      %p172 = por %p170, %p171
      %p173 = scmp.ne.s32.totalorder %s162, %s165
      %p174 = scmp.eq.s32.totalorder %s35, 3
      %p175 = por %p173, %p174
      %p176 = scmp.ne.s32.totalorder %s165, %s166
      %p177 = scmp.eq.s32.totalorder %s35, 0
      %p178 = por %p176, %p177
      %p179 = scmp.ne.s32.totalorder %s165, %s166
      %p180 = scmp.eq.s32.totalorder %s36, 3
      %p181 = por %p179, %p180
      %p183 = scmp.ne.s32.totalorder %s166, %s182
      %p184 = scmp.eq.s32.totalorder %s36, 0
      %p185 = por %p183, %p184
      %s186 = ssub.s32 %s37, %s49
      %p187 = scmp.eq.s32.totalorder %s186, 0
      %s189 = sadd.s32 %s188, 1
      %s190 = scalar_select %p187, %s188, %s189
      %p193 = pneg %p187
      %p194 = scmp.eq.s32.totalorder %s30, 3
      %p195 = por %p193, %p194
      %p196 = scmp.ne.s32.totalorder %s188, %s191
      %p197 = scmp.eq.s32.totalorder %s30, 0
      %p198 = por %p196, %p197
      %p199 = scmp.ne.s32.totalorder %s188, %s191
      %p200 = scmp.eq.s32.totalorder %s35, 3
      %p201 = por %p199, %p200
      %p202 = scmp.ne.s32.totalorder %s191, %s192
      %p203 = scmp.eq.s32.totalorder %s35, 0
      %p204 = por %p202, %p203
      %p205 = scmp.ne.s32.totalorder %s191, %s192
      %p206 = scmp.eq.s32.totalorder %s36, 3
      %p207 = por %p205, %p206
      %p209 = scmp.ne.s32.totalorder %s192, %s208
      %p210 = scmp.eq.s32.totalorder %s36, 0
      %p211 = por %p209, %p210
      %s212 = ssub.s32 %s37, %s49
      %p213 = scmp.eq.s32.totalorder %s212, 0
      %s215 = sadd.s32 %s214, 1
      %s216 = scalar_select %p213, %s214, %s215
      %p219 = pneg %p213
      %p220 = scmp.eq.s32.totalorder %s30, 3
      %p221 = por %p219, %p220
      %p222 = scmp.ne.s32.totalorder %s214, %s217
      %p223 = scmp.eq.s32.totalorder %s30, 0
      %p224 = por %p222, %p223
      %p225 = scmp.ne.s32.totalorder %s214, %s217
      %p226 = scmp.eq.s32.totalorder %s35, 3
      %p227 = por %p225, %p226
      %p228 = scmp.ne.s32.totalorder %s217, %s218
      %p229 = scmp.eq.s32.totalorder %s35, 0
      %p230 = por %p228, %p229
      %p231 = scmp.ne.s32.totalorder %s217, %s218
      %p232 = scmp.eq.s32.totalorder %s36, 3
      %p233 = por %p231, %p232
      %p235 = scmp.ne.s32.totalorder %s218, %s234
      %p236 = scmp.eq.s32.totalorder %s36, 0
      %p237 = por %p235, %p236
      %s238 = ssub.s32 %s37, %s49
      %p239 = scmp.eq.s32.totalorder %s238, 0
      %s241 = sadd.s32 %s240, 1
      %s242 = scalar_select %p239, %s240, %s241
      %p245 = pneg %p239
      %p246 = scmp.eq.s32.totalorder %s30, 3
      %p247 = por %p245, %p246
      %p248 = scmp.ne.s32.totalorder %s240, %s243
      %p249 = scmp.eq.s32.totalorder %s30, 0
      %p250 = por %p248, %p249
      %p251 = scmp.ne.s32.totalorder %s240, %s243
      %p252 = scmp.eq.s32.totalorder %s35, 3
      %p253 = por %p251, %p252
      %p254 = scmp.ne.s32.totalorder %s243, %s244
      %p255 = scmp.eq.s32.totalorder %s35, 0
      %p256 = por %p254, %p255
      %p257 = scmp.ne.s32.totalorder %s243, %s244
      %p258 = scmp.eq.s32.totalorder %s36, 3
      %p259 = por %p257, %p258
      %p261 = scmp.ne.s32.totalorder %s244, %s260
      %p262 = scmp.eq.s32.totalorder %s36, 0
      %p263 = por %p261, %p262
      %s264 = ssub.s32 %s37, %s49
      %p265 = scmp.eq.s32.totalorder %s264, 0
      %s267 = sadd.s32 %s266, 1
      %s268 = scalar_select %p265, %s266, %s267
      %p271 = pneg %p265
      %p272 = scmp.eq.s32.totalorder %s30, 3
      %p273 = por %p271, %p272
      %p274 = scmp.ne.s32.totalorder %s266, %s269
      %p275 = scmp.eq.s32.totalorder %s30, 0
      %p276 = por %p274, %p275
      %p277 = scmp.ne.s32.totalorder %s266, %s269
      %p278 = scmp.eq.s32.totalorder %s35, 3
      %p279 = por %p277, %p278
      %p280 = scmp.ne.s32.totalorder %s269, %s270
      %p281 = scmp.eq.s32.totalorder %s35, 0
      %p282 = por %p280, %p281
      %p283 = scmp.ne.s32.totalorder %s269, %s270
      %p284 = scmp.eq.s32.totalorder %s36, 3
      %p285 = por %p283, %p284
      %p287 = scmp.ne.s32.totalorder %s270, %s286
      %p288 = scmp.eq.s32.totalorder %s36, 0
      %p289 = por %p287, %p288
      %p290 = scmp.le.s32.totalorder 1, %s30
      %p291 = scmp.lt.s32.totalorder %s30, 5
      %p292 = pnand %p290, %p291
      %p293 = pneg %p292
      // Predicated region
      $region9: #{tpu_custom_call.1} parent=5 // pred_check
        _
      $region10: #{tpu_custom_call.1} parent=5 // pred_check_branch
        %295 = sbr.rel (%p292) target = $region12
      $region11: #{tpu_custom_call.1} parent=5 // pred_region
        %s296 = ssub.s32 %s30, 1
      $region12: #{tpu_custom_call.1} parent=5 // pred_fallthru
        _
      %p297 = scmp.lt.s32.totalorder %s30, 4
      // Predicated region
      $region13: #{tpu_custom_call.1} parent=5 // pred_check
        %p298 = pneg %p297
      $region14: #{tpu_custom_call.1} parent=5 // pred_check_branch
        %300 = sbr.rel (%p298) target = $region16
      $region15: #{tpu_custom_call.1} parent=5 // pred_region
        // Predicated region
        $region17: #{tpu_custom_call.1} parent=15 // pred_check
          %p301 = pneg %p62
        $region18: #{tpu_custom_call.1} parent=15 // pred_check_branch
          %303 = sbr.rel (%p301) target = $region20
        $region19: #{tpu_custom_call.1} parent=15 // pred_region
          %s304 = sand.u32 %s52, 1
          %s305 = scalar_lea.sflag [#allocation4], %s304
          %s306 = sand.u32 %s52, 1
          %s307 = smul.addr %s306, 32
          %s308 = scalar_lea.vmem [#allocation3], %s307
          %s309 = smul.u32 2, %s38
          %311 = vsyncadd %s305, 0
          %s312 = smul.addr %s309, 8
          %s313 = scalar_lea.hbm %s0, %s312
          %s314 = sshll.u32 %s313, 4
          %s315 = int_to_ptr.hbm [resolvable:$true] %s314
          %s316 = sshll.u32 %s308, 4
          %s317 = int_to_ptr.vmem [resolvable:$true] %s316
          %322 = dma.hbm_to_vmem [thread:$0]  %s315, 512, %s317, %s305, 512, 256, 16
        $region20: #{tpu_custom_call.1} parent=15 // pred_fallthru
          _
        // Predicated region
        $region21: #{tpu_custom_call.1} parent=15 // pred_check
          %p323 = pneg %p90
        $region22: #{tpu_custom_call.1} parent=15 // pred_check_branch
          %325 = sbr.rel (%p323) target = $region24
        $region23: #{tpu_custom_call.1} parent=15 // pred_region
          %s326 = sand.u32 %s30, 1
          %s327 = scalar_lea.sflag [#allocation7], %s326
          %s328 = sand.u32 %s80, 1
          %s329 = smul.addr %s328, 256
          %s330 = scalar_lea.vmem [#allocation6], %s329
          %s331 = smul.u32 32, %s38
          %333 = vsyncadd %s327, 0
          %s334 = smul.addr %s331, 2
          %s335 = sadd.s32 %s37, %s334
          %s336 = smul.addr %s335, 8
          %s337 = scalar_lea.hbm %s1, %s336
          %s338 = sshll.u32 %s337, 4
          %s339 = int_to_ptr.hbm [resolvable:$true] %s338
          %s340 = sshll.u32 %s330, 4
          %s341 = int_to_ptr.vmem [resolvable:$true] %s340
          %346 = dma.hbm_to_vmem [thread:$0]  %s339, 4096, %s341, %s327, 256, 128, 8
        $region24: #{tpu_custom_call.1} parent=15 // pred_fallthru
          _
        // Predicated region
        $region25: #{tpu_custom_call.1} parent=15 // pred_check
          %p347 = pneg %p118
        $region26: #{tpu_custom_call.1} parent=15 // pred_check_branch
          %349 = sbr.rel (%p347) target = $region28
        $region27: #{tpu_custom_call.1} parent=15 // pred_region
          %s350 = sand.u32 %s30, 1
          %s351 = scalar_lea.sflag [#allocation7], %s350
          %s352 = sand.u32 %s108, 1
          %s353 = smul.addr %s352, 256
          %s354 = scalar_lea.vmem [#allocation8], %s353
          %s355 = smul.u32 32, %s38
          %357 = vsyncadd %s351, 0
          %s358 = smul.addr %s355, 2
          %s359 = sadd.s32 %s37, %s358
          %s360 = smul.addr %s359, 8
          %s361 = scalar_lea.hbm %s2, %s360
          %s362 = sshll.u32 %s361, 4
          %s363 = int_to_ptr.hbm [resolvable:$true] %s362
          %s364 = sshll.u32 %s354, 4
          %s365 = int_to_ptr.vmem [resolvable:$true] %s364
          %370 = dma.hbm_to_vmem [thread:$0]  %s363, 4096, %s365, %s351, 256, 128, 8
        $region28: #{tpu_custom_call.1} parent=15 // pred_fallthru
          _
        // Predicated region
        $region29: #{tpu_custom_call.1} parent=15 // pred_check
          %p371 = pneg %p146
        $region30: #{tpu_custom_call.1} parent=15 // pred_check_branch
          %373 = sbr.rel (%p371) target = $region32
        $region31: #{tpu_custom_call.1} parent=15 // pred_region
          %s374 = sand.u32 %s30, 1
          %s375 = scalar_lea.sflag [#allocation10], %s374
          %s376 = sand.u32 %s136, 1
          %s377 = smul.addr %s376, 256
          %s378 = scalar_lea.vmem [#allocation9], %s377
          %s379 = smul.u32 32, %s38
          %381 = vsyncadd %s375, 0
          %s382 = smul.addr %s379, 2
          %s383 = sadd.s32 %s37, %s382
          %s384 = smul.addr %s383, 8
          %s385 = scalar_lea.hbm %s3, %s384
          %s386 = sshll.u32 %s385, 4
          %s387 = int_to_ptr.hbm [resolvable:$true] %s386
          %s388 = sshll.u32 %s378, 4
          %s389 = int_to_ptr.vmem [resolvable:$true] %s388
          %394 = dma.hbm_to_vmem [thread:$0]  %s387, 4096, %s389, %s375, 256, 128, 8
        $region32: #{tpu_custom_call.1} parent=15 // pred_fallthru
          _
        // Predicated region
        $region33: #{tpu_custom_call.1} parent=15 // pred_check
          %p395 = pneg %p172
        $region34: #{tpu_custom_call.1} parent=15 // pred_check_branch
          %397 = sbr.rel (%p395) target = $region36
        $region35: #{tpu_custom_call.1} parent=15 // pred_region
          %p398 = scmp.lt.s32.totalorder %s37, 1
          %s399 = scalar_select %p398, %s37, 1
          %s400 = scalar_lea.vmem %s4, %s399
        $region36: #{tpu_custom_call.1} parent=15 // pred_fallthru
          _
        // Predicated region
        $region37: #{tpu_custom_call.1} parent=15 // pred_check
          %p401 = pneg %p198
        $region38: #{tpu_custom_call.1} parent=15 // pred_check_branch
          %403 = sbr.rel (%p401) target = $region40
        $region39: #{tpu_custom_call.1} parent=15 // pred_region
          %p404 = scmp.lt.s32.totalorder %s37, 1
          %s405 = scalar_select %p404, %s37, 1
          %s406 = scalar_lea.vmem %s5, %s405
        $region40: #{tpu_custom_call.1} parent=15 // pred_fallthru
          _
        // Predicated region
        $region41: #{tpu_custom_call.1} parent=15 // pred_check
          %p407 = pneg %p224
        $region42: #{tpu_custom_call.1} parent=15 // pred_check_branch
          %409 = sbr.rel (%p407) target = $region44
        $region43: #{tpu_custom_call.1} parent=15 // pred_region
          %s410 = sand.u32 %s30, 1
          %s411 = scalar_lea.sflag [#allocation10], %s410
          %s412 = sand.u32 %s214, 1
          %s413 = scalar_lea.vmem [#allocation11], %s412
          %415 = vsyncadd %s411, 0
          %s416 = scalar_lea.hbm %s6, %s37
          %s418 = sshll.u32 %s416, 4
          %s419 = int_to_ptr.hbm [resolvable:$true] %s418
          %s420 = sshll.u32 %s413, 4
          %s421 = int_to_ptr.vmem [resolvable:$true] %s420
          %423 = dma.hbm_to_vmem [thread:$0]  %s419, 16, %s421, %s411
        $region44: #{tpu_custom_call.1} parent=15 // pred_fallthru
          _
      $region16: #{tpu_custom_call.1} parent=5 // pred_fallthru
        _
      %p424 = scmp.le.s32.totalorder 1, %s30
      %p425 = scmp.lt.s32.totalorder %s30, 5
      %p426 = pnand %p424, %p425
      %p427 = pneg %p426
      // Predicated region
      $region45: #{tpu_custom_call.1} parent=5 // pred_check
        _
      $region46: #{tpu_custom_call.1} parent=5 // pred_check_branch
        %429 = sbr.rel (%p426) target = $region48
      $region47: #{tpu_custom_call.1} parent=5 // pred_region
        %s430 = ssub.s32 %s30, 1
        %s431 = sand.u32 %s55, 1
        %s432 = scalar_lea.sflag [#allocation4], %s431
        %s433 = sand.u32 %s55, 1
        %s434 = smul.addr %s433, 32
        %s435 = scalar_lea.vmem [#allocation3], %s434
        // Predicated region
        $region49: #{tpu_custom_call.1} parent=47 // pred_check
          %p436 = pneg %p68
        $region50: #{tpu_custom_call.1} parent=47 // pred_check_branch
          %438 = sbr.rel (%p436) target = $region52
        $region51: #{tpu_custom_call.1} parent=47 // pred_region
          %440 = dma.done %s432, 512
        $region52: #{tpu_custom_call.1} parent=47 // pred_fallthru
          _
        %s441 = sand.u32 %s35, 1
        %s442 = scalar_lea.sflag [#allocation7], %s441
        %s443 = sand.u32 %s83, 1
        %s444 = smul.addr %s443, 256
        %s445 = scalar_lea.vmem [#allocation6], %s444
        // Predicated region
        $region53: #{tpu_custom_call.1} parent=47 // pred_check
          %p446 = pneg %p96
        $region54: #{tpu_custom_call.1} parent=47 // pred_check_branch
          %448 = sbr.rel (%p446) target = $region56
        $region55: #{tpu_custom_call.1} parent=47 // pred_region
          %450 = dma.done %s442, 4096
        $region56: #{tpu_custom_call.1} parent=47 // pred_fallthru
          _
        %s451 = sand.u32 %s35, 1
        %s452 = scalar_lea.sflag [#allocation7], %s451
        %s453 = sand.u32 %s111, 1
        %s454 = smul.addr %s453, 256
        %s455 = scalar_lea.vmem [#allocation8], %s454
        // Predicated region
        $region57: #{tpu_custom_call.1} parent=47 // pred_check
          %p456 = pneg %p124
        $region58: #{tpu_custom_call.1} parent=47 // pred_check_branch
          %458 = sbr.rel (%p456) target = $region60
        $region59: #{tpu_custom_call.1} parent=47 // pred_region
          %460 = dma.done %s452, 4096
        $region60: #{tpu_custom_call.1} parent=47 // pred_fallthru
          _
        %s461 = sand.u32 %s35, 1
        %s462 = scalar_lea.sflag [#allocation10], %s461
        %s463 = sand.u32 %s139, 1
        %s464 = smul.addr %s463, 256
        %s465 = scalar_lea.vmem [#allocation9], %s464
        // Predicated region
        $region61: #{tpu_custom_call.1} parent=47 // pred_check
          %p466 = pneg %p152
        $region62: #{tpu_custom_call.1} parent=47 // pred_check_branch
          %468 = sbr.rel (%p466) target = $region64
        $region63: #{tpu_custom_call.1} parent=47 // pred_region
          %470 = dma.done %s462, 4096
        $region64: #{tpu_custom_call.1} parent=47 // pred_fallthru
          _
        %s471 = sand.u32 %s35, 1
        %s472 = scalar_lea.sflag [#allocation10], %s471
        %s473 = sand.u32 %s217, 1
        %s474 = scalar_lea.vmem [#allocation11], %s473
        // Predicated region
        $region65: #{tpu_custom_call.1} parent=47 // pred_check
          %p475 = pneg %p230
        $region66: #{tpu_custom_call.1} parent=47 // pred_check_branch
          %477 = sbr.rel (%p475) target = $region68
        $region67: #{tpu_custom_call.1} parent=47 // pred_region
          %479 = dma.done %s472, 16
        $region68: #{tpu_custom_call.1} parent=47 // pred_fallthru
          _
        %s480 = sand.u32 %s55, 1
        %s481 = scalar_lea.sflag [#allocation4], %s480
        %s482 = sand.u32 %s55, 1
        %s483 = smul.addr %s482, 32
        %s484 = scalar_lea.vmem [#allocation3], %s483
        %p485 = pneg %p68
        %p486 = pneg %p65
        %s487 = sand.u32 %s35, 1
        %s488 = scalar_lea.sflag [#allocation7], %s487
        %s489 = sand.u32 %s83, 1
        %s490 = smul.addr %s489, 256
        %s491 = scalar_lea.vmem [#allocation6], %s490
        %p492 = pneg %p96
        %p493 = pneg %p93
        %s494 = sand.u32 %s35, 1
        %s495 = scalar_lea.sflag [#allocation7], %s494
        %s496 = sand.u32 %s111, 1
        %s497 = smul.addr %s496, 256
        %s498 = scalar_lea.vmem [#allocation8], %s497
        %p499 = pneg %p124
        %p500 = pneg %p121
        %s501 = sand.u32 %s35, 1
        %s502 = scalar_lea.sflag [#allocation10], %s501
        %s503 = sand.u32 %s139, 1
        %s504 = smul.addr %s503, 256
        %s505 = scalar_lea.vmem [#allocation9], %s504
        %p506 = pneg %p152
        %p507 = pneg %p149
        %p508 = scmp.lt.s32.totalorder %s39, 1
        %s509 = scalar_select %p508, %s39, 1
        %s510 = scalar_lea.vmem %s4, %s509
        %p511 = pneg %p178
        %p512 = pneg %p175
        %p513 = scmp.lt.s32.totalorder %s39, 1
        %s514 = scalar_select %p513, %s39, 1
        %s515 = scalar_lea.vmem %s5, %s514
        %p516 = pneg %p204
        %p517 = pneg %p201
        %s518 = sand.u32 %s35, 1
        %s519 = scalar_lea.sflag [#allocation10], %s518
        %s520 = sand.u32 %s217, 1
        %s521 = scalar_lea.vmem [#allocation11], %s520
        %p522 = pneg %p230
        %p523 = pneg %p227
        %p524 = pneg %p256
        %p525 = pneg %p253
        %s526 = sand.u32 %s243, 1
        %s527 = scalar_lea.sflag [#allocation5], %s526
        %s528 = sand.u32 %s243, 1
        %s529 = smul.addr %s528, 16
        %s530 = scalar_lea.vmem [#allocation12], %s529
        %p531 = pneg %p282
        %p532 = pneg %p279
        %s533 = sand.u32 %s269, 1
        %s534 = scalar_lea.sflag [#allocation14], %s533
        %s535 = sand.u32 %s269, 1
        %s536 = scalar_lea.vmem [#allocation13], %s535
        %s537 = smul.u32 2, %s40
        %s538 = smul.u32 32, %s40
        %s539 = smul.u32 32, %s40
        %s540 = smul.u32 32, %s40
        %p541 = scmp.lt.s32.totalorder %s39, 1
        %s542 = scalar_select %p541, %s39, 1
        %s543 = scalar_lea.vmem %s4, %s542
        %p544 = scmp.lt.s32.totalorder %s39, 1
        %s545 = scalar_select %p544, %s39, 1
        %s546 = scalar_lea.vmem %s5, %s545
        %v547 = vld [vmem:[%s445] sm:$0xff]
        %v548 = vld [vmem:[%s445 + $0x8] sm:$0xff]
        %v549 = vld [vmem:[%s445 + $0x10] sm:$0xff]
        %v550 = vld [vmem:[%s445 + $0x18] sm:$0xff]
        %v551 = vld [vmem:[%s445 + $0x20] sm:$0xff]
        %v552 = vld [vmem:[%s445 + $0x28] sm:$0xff]
        %v553 = vld [vmem:[%s445 + $0x30] sm:$0xff]
        %v554 = vld [vmem:[%s445 + $0x38] sm:$0xff]
        %v555 = vld [vmem:[%s445 + $0x40] sm:$0xff]
        %v556 = vld [vmem:[%s445 + $0x48] sm:$0xff]
        %v557 = vld [vmem:[%s445 + $0x50] sm:$0xff]
        %v558 = vld [vmem:[%s445 + $0x58] sm:$0xff]
        %v559 = vld [vmem:[%s445 + $0x60] sm:$0xff]
        %v560 = vld [vmem:[%s445 + $0x68] sm:$0xff]
        %v561 = vld [vmem:[%s445 + $0x70] sm:$0xff]
        %v562 = vld [vmem:[%s445 + $0x78] sm:$0xff]
        %v563 = vld [vmem:[%s445 + $0x80] sm:$0xff]
        %v564 = vld [vmem:[%s445 + $0x88] sm:$0xff]
        %v565 = vld [vmem:[%s445 + $0x90] sm:$0xff]
        %v566 = vld [vmem:[%s445 + $0x98] sm:$0xff]
        %v567 = vld [vmem:[%s445 + $0xa0] sm:$0xff]
        %v568 = vld [vmem:[%s445 + $0xa8] sm:$0xff]
        %v569 = vld [vmem:[%s445 + $0xb0] sm:$0xff]
        %v570 = vld [vmem:[%s445 + $0xb8] sm:$0xff]
        %v571 = vld [vmem:[%s445 + $0xc0] sm:$0xff]
        %v572 = vld [vmem:[%s445 + $0xc8] sm:$0xff]
        %v573 = vld [vmem:[%s445 + $0xd0] sm:$0xff]
        %v574 = vld [vmem:[%s445 + $0xd8] sm:$0xff]
        %v575 = vld [vmem:[%s445 + $0xe0] sm:$0xff]
        %v576 = vld [vmem:[%s445 + $0xe8] sm:$0xff]
        %v577 = vld [vmem:[%s445 + $0xf0] sm:$0xff]
        %v578 = vld [vmem:[%s445 + $0xf8] sm:$0xff]
        %v579 = vld [vmem:[%s455] sm:$0xff]
        %v580 = vld [vmem:[%s455 + $0x8] sm:$0xff]
        %v581 = vld [vmem:[%s455 + $0x10] sm:$0xff]
        %v582 = vld [vmem:[%s455 + $0x18] sm:$0xff]
        %v583 = vld [vmem:[%s455 + $0x20] sm:$0xff]
        %v584 = vld [vmem:[%s455 + $0x28] sm:$0xff]
        %v585 = vld [vmem:[%s455 + $0x30] sm:$0xff]
        %v586 = vld [vmem:[%s455 + $0x38] sm:$0xff]
        %v587 = vld [vmem:[%s455 + $0x40] sm:$0xff]
        %v588 = vld [vmem:[%s455 + $0x48] sm:$0xff]
        %v589 = vld [vmem:[%s455 + $0x50] sm:$0xff]
        %v590 = vld [vmem:[%s455 + $0x58] sm:$0xff]
        %v591 = vld [vmem:[%s455 + $0x60] sm:$0xff]
        %v592 = vld [vmem:[%s455 + $0x68] sm:$0xff]
        %v593 = vld [vmem:[%s455 + $0x70] sm:$0xff]
        %v594 = vld [vmem:[%s455 + $0x78] sm:$0xff]
        %v595 = vld [vmem:[%s455 + $0x80] sm:$0xff]
        %v596 = vld [vmem:[%s455 + $0x88] sm:$0xff]
        %v597 = vld [vmem:[%s455 + $0x90] sm:$0xff]
        %v598 = vld [vmem:[%s455 + $0x98] sm:$0xff]
        %v599 = vld [vmem:[%s455 + $0xa0] sm:$0xff]
        %v600 = vld [vmem:[%s455 + $0xa8] sm:$0xff]
        %v601 = vld [vmem:[%s455 + $0xb0] sm:$0xff]
        %v602 = vld [vmem:[%s455 + $0xb8] sm:$0xff]
        %v603 = vld [vmem:[%s455 + $0xc0] sm:$0xff]
        %v604 = vld [vmem:[%s455 + $0xc8] sm:$0xff]
        %v605 = vld [vmem:[%s455 + $0xd0] sm:$0xff]
        %v606 = vld [vmem:[%s455 + $0xd8] sm:$0xff]
        %v607 = vld [vmem:[%s455 + $0xe0] sm:$0xff]
        %v608 = vld [vmem:[%s455 + $0xe8] sm:$0xff]
        %v609 = vld [vmem:[%s455 + $0xf0] sm:$0xff]
        %v610 = vld [vmem:[%s455 + $0xf8] sm:$0xff]
        %v611 = vmax.f32 %v579, 0.0
        %v612 = vmax.f32 %v580, 0.0
        %v613 = vmax.f32 %v581, 0.0
        %v614 = vmax.f32 %v582, 0.0
        %v615 = vmax.f32 %v583, 0.0
        %v616 = vmax.f32 %v584, 0.0
        %v617 = vmax.f32 %v585, 0.0
        %v618 = vmax.f32 %v586, 0.0
        %v619 = vmax.f32 %v587, 0.0
        %v620 = vmax.f32 %v588, 0.0
        %v621 = vmax.f32 %v589, 0.0
        %v622 = vmax.f32 %v590, 0.0
        %v623 = vmax.f32 %v591, 0.0
        %v624 = vmax.f32 %v592, 0.0
        %v625 = vmax.f32 %v593, 0.0
        %v626 = vmax.f32 %v594, 0.0
        %v627 = vmax.f32 %v595, 0.0
        %v628 = vmax.f32 %v596, 0.0
        %v629 = vmax.f32 %v597, 0.0
        %v630 = vmax.f32 %v598, 0.0
        %v631 = vmax.f32 %v599, 0.0
        %v632 = vmax.f32 %v600, 0.0
        %v633 = vmax.f32 %v601, 0.0
        %v634 = vmax.f32 %v602, 0.0
        %v635 = vmax.f32 %v603, 0.0
        %v636 = vmax.f32 %v604, 0.0
        %v637 = vmax.f32 %v605, 0.0
        %v638 = vmax.f32 %v606, 0.0
        %v639 = vmax.f32 %v607, 0.0
        %v640 = vmax.f32 %v608, 0.0
        %v641 = vmax.f32 %v609, 0.0
        %v642 = vmax.f32 %v610, 0.0
        %v643 = vand.u32 2147483647, %v579
        %v644 = vand.u32 2147483647, %v580
        %v645 = vand.u32 2147483647, %v581
        %v646 = vand.u32 2147483647, %v582
        %v647 = vand.u32 2147483647, %v583
        %v648 = vand.u32 2147483647, %v584
        %v649 = vand.u32 2147483647, %v585
        %v650 = vand.u32 2147483647, %v586
        %v651 = vand.u32 2147483647, %v587
        %v652 = vand.u32 2147483647, %v588
        %v653 = vand.u32 2147483647, %v589
        %v654 = vand.u32 2147483647, %v590
        %v655 = vand.u32 2147483647, %v591
        %v656 = vand.u32 2147483647, %v592
        %v657 = vand.u32 2147483647, %v593
        %v658 = vand.u32 2147483647, %v594
        %v659 = vand.u32 2147483647, %v595
        %v660 = vand.u32 2147483647, %v596
        %v661 = vand.u32 2147483647, %v597
        %v662 = vand.u32 2147483647, %v598
        %v663 = vand.u32 2147483647, %v599
        %v664 = vand.u32 2147483647, %v600
        %v665 = vand.u32 2147483647, %v601
        %v666 = vand.u32 2147483647, %v602
        %v667 = vand.u32 2147483647, %v603
        %v668 = vand.u32 2147483647, %v604
        %v669 = vand.u32 2147483647, %v605
        %v670 = vand.u32 2147483647, %v606
        %v671 = vand.u32 2147483647, %v607
        %v672 = vand.u32 2147483647, %v608
        %v673 = vand.u32 2147483647, %v609
        %v674 = vand.u32 2147483647, %v610
        %v675 = vsub.f32 0.0, %v643
        %v676 = vsub.f32 0.0, %v644
        %v677 = vsub.f32 0.0, %v645
        %v678 = vsub.f32 0.0, %v646
        %v679 = vsub.f32 0.0, %v647
        %v680 = vsub.f32 0.0, %v648
        %v681 = vsub.f32 0.0, %v649
        %v682 = vsub.f32 0.0, %v650
        %v683 = vsub.f32 0.0, %v651
        %v684 = vsub.f32 0.0, %v652
        %v685 = vsub.f32 0.0, %v653
        %v686 = vsub.f32 0.0, %v654
        %v687 = vsub.f32 0.0, %v655
        %v688 = vsub.f32 0.0, %v656
        %v689 = vsub.f32 0.0, %v657
        %v690 = vsub.f32 0.0, %v658
        %v691 = vsub.f32 0.0, %v659
        %v692 = vsub.f32 0.0, %v660
        %v693 = vsub.f32 0.0, %v661
        %v694 = vsub.f32 0.0, %v662
        %v695 = vsub.f32 0.0, %v663
        %v696 = vsub.f32 0.0, %v664
        %v697 = vsub.f32 0.0, %v665
        %v698 = vsub.f32 0.0, %v666
        %v699 = vsub.f32 0.0, %v667
        %v700 = vsub.f32 0.0, %v668
        %v701 = vsub.f32 0.0, %v669
        %v702 = vsub.f32 0.0, %v670
        %v703 = vsub.f32 0.0, %v671
        %v704 = vsub.f32 0.0, %v672
        %v705 = vsub.f32 0.0, %v673
        %v706 = vsub.f32 0.0, %v674
        %v707 = vmul.f32 %v675, 1.442695
        %v708 = vpow.pop %v707
        %v709 = vmul.f32 %v676, 1.442695
        %v710 = vpow.pop %v709
        %v711 = vmul.f32 %v677, 1.442695
        %v712 = vpow.pop %v711
        %v713 = vmul.f32 %v678, 1.442695
        %v714 = vpow.pop %v713
        %v715 = vmul.f32 %v679, 1.442695
        %v716 = vpow.pop %v715
        %v717 = vmul.f32 %v680, 1.442695
        %v718 = vpow.pop %v717
        %v719 = vmul.f32 %v681, 1.442695
        %v720 = vpow.pop %v719
        %v721 = vmul.f32 %v682, 1.442695
        %v722 = vpow.pop %v721
        %v723 = vmul.f32 %v683, 1.442695
        %v724 = vpow.pop %v723
        %v725 = vmul.f32 %v684, 1.442695
        %v726 = vpow.pop %v725
        %v727 = vmul.f32 %v685, 1.442695
        %v728 = vpow.pop %v727
        %v729 = vmul.f32 %v686, 1.442695
        %v730 = vpow.pop %v729
        %v731 = vmul.f32 %v687, 1.442695
        %v732 = vpow.pop %v731
        %v733 = vmul.f32 %v688, 1.442695
        %v734 = vpow.pop %v733
        %v735 = vmul.f32 %v689, 1.442695
        %v736 = vpow.pop %v735
        %v737 = vmul.f32 %v690, 1.442695
        %v738 = vpow.pop %v737
        %v739 = vmul.f32 %v691, 1.442695
        %v740 = vpow.pop %v739
        %v741 = vmul.f32 %v692, 1.442695
        %v742 = vpow.pop %v741
        %v743 = vmul.f32 %v693, 1.442695
        %v744 = vpow.pop %v743
        %v745 = vmul.f32 %v694, 1.442695
        %v746 = vpow.pop %v745
        %v747 = vmul.f32 %v695, 1.442695
        %v748 = vpow.pop %v747
        %v749 = vmul.f32 %v696, 1.442695
        %v750 = vpow.pop %v749
        %v751 = vmul.f32 %v697, 1.442695
        %v752 = vpow.pop %v751
        %v753 = vmul.f32 %v698, 1.442695
        %v754 = vpow.pop %v753
        %v755 = vmul.f32 %v699, 1.442695
        %v756 = vpow.pop %v755
        %v757 = vmul.f32 %v700, 1.442695
        %v758 = vpow.pop %v757
        %v759 = vmul.f32 %v701, 1.442695
        %v760 = vpow.pop %v759
        %v761 = vmul.f32 %v702, 1.442695
        %v762 = vpow.pop %v761
        %v763 = vmul.f32 %v703, 1.442695
        %v764 = vpow.pop %v763
        %v765 = vmul.f32 %v704, 1.442695
        %v766 = vpow.pop %v765
        %v767 = vmul.f32 %v705, 1.442695
        %v768 = vpow.pop %v767
        %v769 = vmul.f32 %v706, 1.442695
        %v770 = vpow.pop %v769
        %v771 = vadd.f32 %v708, 1.0
        %v772 = vlog2.pop %v771
        %v773 = vmul.f32 %v772, 0.6931472
        %v774 = vmul.f32 -0.5, %v708
        %v775 = vadd.f32 %v774, 1.0
        %v776 = vmul.f32 %v775, %v708
        %v777 = vand.u32 2147483647, %v708
        %vm778 = vcmp.lt.f32.partialorder %v777, 0.0004427343
        %v779 = vsel %vm778, %v776, %v773
        %v780 = vadd.f32 %v710, 1.0
        %v781 = vlog2.pop %v780
        %v782 = vmul.f32 %v781, 0.6931472
        %v783 = vmul.f32 -0.5, %v710
        %v784 = vadd.f32 %v783, 1.0
        %v785 = vmul.f32 %v784, %v710
        %v786 = vand.u32 2147483647, %v710
        %vm787 = vcmp.lt.f32.partialorder %v786, 0.0004427343
        %v788 = vsel %vm787, %v785, %v782
        %v789 = vadd.f32 %v712, 1.0
        %v790 = vlog2.pop %v789
        %v791 = vmul.f32 %v790, 0.6931472
        %v792 = vmul.f32 -0.5, %v712
        %v793 = vadd.f32 %v792, 1.0
        %v794 = vmul.f32 %v793, %v712
        %v795 = vand.u32 2147483647, %v712
        %vm796 = vcmp.lt.f32.partialorder %v795, 0.0004427343
        %v797 = vsel %vm796, %v794, %v791
        %v798 = vadd.f32 %v714, 1.0
        %v799 = vlog2.pop %v798
        %v800 = vmul.f32 %v799, 0.6931472
        %v801 = vmul.f32 -0.5, %v714
        %v802 = vadd.f32 %v801, 1.0
        %v803 = vmul.f32 %v802, %v714
        %v804 = vand.u32 2147483647, %v714
        %vm805 = vcmp.lt.f32.partialorder %v804, 0.0004427343
        %v806 = vsel %vm805, %v803, %v800
        %v807 = vadd.f32 %v716, 1.0
        %v808 = vlog2.pop %v807
        %v809 = vmul.f32 %v808, 0.6931472
        %v810 = vmul.f32 -0.5, %v716
        %v811 = vadd.f32 %v810, 1.0
        %v812 = vmul.f32 %v811, %v716
        %v813 = vand.u32 2147483647, %v716
        %vm814 = vcmp.lt.f32.partialorder %v813, 0.0004427343
        %v815 = vsel %vm814, %v812, %v809
        %v816 = vadd.f32 %v718, 1.0
        %v817 = vlog2.pop %v816
        %v818 = vmul.f32 %v817, 0.6931472
        %v819 = vmul.f32 -0.5, %v718
        %v820 = vadd.f32 %v819, 1.0
        %v821 = vmul.f32 %v820, %v718
        %v822 = vand.u32 2147483647, %v718
        %vm823 = vcmp.lt.f32.partialorder %v822, 0.0004427343
        %v824 = vsel %vm823, %v821, %v818
        %v825 = vadd.f32 %v720, 1.0
        %v826 = vlog2.pop %v825
        %v827 = vmul.f32 %v826, 0.6931472
        %v828 = vmul.f32 -0.5, %v720
        %v829 = vadd.f32 %v828, 1.0
        %v830 = vmul.f32 %v829, %v720
        %v831 = vand.u32 2147483647, %v720
        %vm832 = vcmp.lt.f32.partialorder %v831, 0.0004427343
        %v833 = vsel %vm832, %v830, %v827
        %v834 = vadd.f32 %v722, 1.0
        %v835 = vlog2.pop %v834
        %v836 = vmul.f32 %v835, 0.6931472
        %v837 = vmul.f32 -0.5, %v722
        %v838 = vadd.f32 %v837, 1.0
        %v839 = vmul.f32 %v838, %v722
        %v840 = vand.u32 2147483647, %v722
        %vm841 = vcmp.lt.f32.partialorder %v840, 0.0004427343
        %v842 = vsel %vm841, %v839, %v836
        %v843 = vadd.f32 %v724, 1.0
        %v844 = vlog2.pop %v843
        %v845 = vmul.f32 %v844, 0.6931472
        %v846 = vmul.f32 -0.5, %v724
        %v847 = vadd.f32 %v846, 1.0
        %v848 = vmul.f32 %v847, %v724
        %v849 = vand.u32 2147483647, %v724
        %vm850 = vcmp.lt.f32.partialorder %v849, 0.0004427343
        %v851 = vsel %vm850, %v848, %v845
        %v852 = vadd.f32 %v726, 1.0
        %v853 = vlog2.pop %v852
        %v854 = vmul.f32 %v853, 0.6931472
        %v855 = vmul.f32 -0.5, %v726
        %v856 = vadd.f32 %v855, 1.0
        %v857 = vmul.f32 %v856, %v726
        %v858 = vand.u32 2147483647, %v726
        %vm859 = vcmp.lt.f32.partialorder %v858, 0.0004427343
        %v860 = vsel %vm859, %v857, %v854
        %v861 = vadd.f32 %v728, 1.0
        %v862 = vlog2.pop %v861
        %v863 = vmul.f32 %v862, 0.6931472
        %v864 = vmul.f32 -0.5, %v728
        %v865 = vadd.f32 %v864, 1.0
        %v866 = vmul.f32 %v865, %v728
        %v867 = vand.u32 2147483647, %v728
        %vm868 = vcmp.lt.f32.partialorder %v867, 0.0004427343
        %v869 = vsel %vm868, %v866, %v863
        %v870 = vadd.f32 %v730, 1.0
        %v871 = vlog2.pop %v870
        %v872 = vmul.f32 %v871, 0.6931472
        %v873 = vmul.f32 -0.5, %v730
        %v874 = vadd.f32 %v873, 1.0
        %v875 = vmul.f32 %v874, %v730
        %v876 = vand.u32 2147483647, %v730
        %vm877 = vcmp.lt.f32.partialorder %v876, 0.0004427343
        %v878 = vsel %vm877, %v875, %v872
        %v879 = vadd.f32 %v732, 1.0
        %v880 = vlog2.pop %v879
        %v881 = vmul.f32 %v880, 0.6931472
        %v882 = vmul.f32 -0.5, %v732
        %v883 = vadd.f32 %v882, 1.0
        %v884 = vmul.f32 %v883, %v732
        %v885 = vand.u32 2147483647, %v732
        %vm886 = vcmp.lt.f32.partialorder %v885, 0.0004427343
        %v887 = vsel %vm886, %v884, %v881
        %v888 = vadd.f32 %v734, 1.0
        %v889 = vlog2.pop %v888
        %v890 = vmul.f32 %v889, 0.6931472
        %v891 = vmul.f32 -0.5, %v734
        %v892 = vadd.f32 %v891, 1.0
        %v893 = vmul.f32 %v892, %v734
        %v894 = vand.u32 2147483647, %v734
        %vm895 = vcmp.lt.f32.partialorder %v894, 0.0004427343
        %v896 = vsel %vm895, %v893, %v890
        %v897 = vadd.f32 %v736, 1.0
        %v898 = vlog2.pop %v897
        %v899 = vmul.f32 %v898, 0.6931472
        %v900 = vmul.f32 -0.5, %v736
        %v901 = vadd.f32 %v900, 1.0
        %v902 = vmul.f32 %v901, %v736
        %v903 = vand.u32 2147483647, %v736
        %vm904 = vcmp.lt.f32.partialorder %v903, 0.0004427343
        %v905 = vsel %vm904, %v902, %v899
        %v906 = vadd.f32 %v738, 1.0
        %v907 = vlog2.pop %v906
        %v908 = vmul.f32 %v907, 0.6931472
        %v909 = vmul.f32 -0.5, %v738
        %v910 = vadd.f32 %v909, 1.0
        %v911 = vmul.f32 %v910, %v738
        %v912 = vand.u32 2147483647, %v738
        %vm913 = vcmp.lt.f32.partialorder %v912, 0.0004427343
        %v914 = vsel %vm913, %v911, %v908
        %v915 = vadd.f32 %v740, 1.0
        %v916 = vlog2.pop %v915
        %v917 = vmul.f32 %v916, 0.6931472
        %v918 = vmul.f32 -0.5, %v740
        %v919 = vadd.f32 %v918, 1.0
        %v920 = vmul.f32 %v919, %v740
        %v921 = vand.u32 2147483647, %v740
        %vm922 = vcmp.lt.f32.partialorder %v921, 0.0004427343
        %v923 = vsel %vm922, %v920, %v917
        %v924 = vadd.f32 %v742, 1.0
        %v925 = vlog2.pop %v924
        %v926 = vmul.f32 %v925, 0.6931472
        %v927 = vmul.f32 -0.5, %v742
        %v928 = vadd.f32 %v927, 1.0
        %v929 = vmul.f32 %v928, %v742
        %v930 = vand.u32 2147483647, %v742
        %vm931 = vcmp.lt.f32.partialorder %v930, 0.0004427343
        %v932 = vsel %vm931, %v929, %v926
        %v933 = vadd.f32 %v744, 1.0
        %v934 = vlog2.pop %v933
        %v935 = vmul.f32 %v934, 0.6931472
        %v936 = vmul.f32 -0.5, %v744
        %v937 = vadd.f32 %v936, 1.0
        %v938 = vmul.f32 %v937, %v744
        %v939 = vand.u32 2147483647, %v744
        %vm940 = vcmp.lt.f32.partialorder %v939, 0.0004427343
        %v941 = vsel %vm940, %v938, %v935
        %v942 = vadd.f32 %v746, 1.0
        %v943 = vlog2.pop %v942
        %v944 = vmul.f32 %v943, 0.6931472
        %v945 = vmul.f32 -0.5, %v746
        %v946 = vadd.f32 %v945, 1.0
        %v947 = vmul.f32 %v946, %v746
        %v948 = vand.u32 2147483647, %v746
        %vm949 = vcmp.lt.f32.partialorder %v948, 0.0004427343
        %v950 = vsel %vm949, %v947, %v944
        %v951 = vadd.f32 %v748, 1.0
        %v952 = vlog2.pop %v951
        %v953 = vmul.f32 %v952, 0.6931472
        %v954 = vmul.f32 -0.5, %v748
        %v955 = vadd.f32 %v954, 1.0
        %v956 = vmul.f32 %v955, %v748
        %v957 = vand.u32 2147483647, %v748
        %vm958 = vcmp.lt.f32.partialorder %v957, 0.0004427343
        %v959 = vsel %vm958, %v956, %v953
        %v960 = vadd.f32 %v750, 1.0
        %v961 = vlog2.pop %v960
        %v962 = vmul.f32 %v961, 0.6931472
        %v963 = vmul.f32 -0.5, %v750
        %v964 = vadd.f32 %v963, 1.0
        %v965 = vmul.f32 %v964, %v750
        %v966 = vand.u32 2147483647, %v750
        %vm967 = vcmp.lt.f32.partialorder %v966, 0.0004427343
        %v968 = vsel %vm967, %v965, %v962
        %v969 = vadd.f32 %v752, 1.0
        %v970 = vlog2.pop %v969
        %v971 = vmul.f32 %v970, 0.6931472
        %v972 = vmul.f32 -0.5, %v752
        %v973 = vadd.f32 %v972, 1.0
        %v974 = vmul.f32 %v973, %v752
        %v975 = vand.u32 2147483647, %v752
        %vm976 = vcmp.lt.f32.partialorder %v975, 0.0004427343
        %v977 = vsel %vm976, %v974, %v971
        %v978 = vadd.f32 %v754, 1.0
        %v979 = vlog2.pop %v978
        %v980 = vmul.f32 %v979, 0.6931472
        %v981 = vmul.f32 -0.5, %v754
        %v982 = vadd.f32 %v981, 1.0
        %v983 = vmul.f32 %v982, %v754
        %v984 = vand.u32 2147483647, %v754
        %vm985 = vcmp.lt.f32.partialorder %v984, 0.0004427343
        %v986 = vsel %vm985, %v983, %v980
        %v987 = vadd.f32 %v756, 1.0
        %v988 = vlog2.pop %v987
        %v989 = vmul.f32 %v988, 0.6931472
        %v990 = vmul.f32 -0.5, %v756
        %v991 = vadd.f32 %v990, 1.0
        %v992 = vmul.f32 %v991, %v756
        %v993 = vand.u32 2147483647, %v756
        %vm994 = vcmp.lt.f32.partialorder %v993, 0.0004427343
        %v995 = vsel %vm994, %v992, %v989
        %v996 = vadd.f32 %v758, 1.0
        %v997 = vlog2.pop %v996
        %v998 = vmul.f32 %v997, 0.6931472
        %v999 = vmul.f32 -0.5, %v758
        %v1000 = vadd.f32 %v999, 1.0
        %v1001 = vmul.f32 %v1000, %v758
        %v1002 = vand.u32 2147483647, %v758
        %vm1003 = vcmp.lt.f32.partialorder %v1002, 0.0004427343
        %v1004 = vsel %vm1003, %v1001, %v998
        %v1005 = vadd.f32 %v760, 1.0
        %v1006 = vlog2.pop %v1005
        %v1007 = vmul.f32 %v1006, 0.6931472
        %v1008 = vmul.f32 -0.5, %v760
        %v1009 = vadd.f32 %v1008, 1.0
        %v1010 = vmul.f32 %v1009, %v760
        %v1011 = vand.u32 2147483647, %v760
        %vm1012 = vcmp.lt.f32.partialorder %v1011, 0.0004427343
        %v1013 = vsel %vm1012, %v1010, %v1007
        %v1014 = vadd.f32 %v762, 1.0
        %v1015 = vlog2.pop %v1014
        %v1016 = vmul.f32 %v1015, 0.6931472
        %v1017 = vmul.f32 -0.5, %v762
        %v1018 = vadd.f32 %v1017, 1.0
        %v1019 = vmul.f32 %v1018, %v762
        %v1020 = vand.u32 2147483647, %v762
        %vm1021 = vcmp.lt.f32.partialorder %v1020, 0.0004427343
        %v1022 = vsel %vm1021, %v1019, %v1016
        %v1023 = vadd.f32 %v764, 1.0
        %v1024 = vlog2.pop %v1023
        %v1025 = vmul.f32 %v1024, 0.6931472
        %v1026 = vmul.f32 -0.5, %v764
        %v1027 = vadd.f32 %v1026, 1.0
        %v1028 = vmul.f32 %v1027, %v764
        %v1029 = vand.u32 2147483647, %v764
        %vm1030 = vcmp.lt.f32.partialorder %v1029, 0.0004427343
        %v1031 = vsel %vm1030, %v1028, %v1025
        %v1032 = vadd.f32 %v766, 1.0
        %v1033 = vlog2.pop %v1032
        %v1034 = vmul.f32 %v1033, 0.6931472
        %v1035 = vmul.f32 -0.5, %v766
        %v1036 = vadd.f32 %v1035, 1.0
        %v1037 = vmul.f32 %v1036, %v766
        %v1038 = vand.u32 2147483647, %v766
        %vm1039 = vcmp.lt.f32.partialorder %v1038, 0.0004427343
        %v1040 = vsel %vm1039, %v1037, %v1034
        %v1041 = vadd.f32 %v768, 1.0
        %v1042 = vlog2.pop %v1041
        %v1043 = vmul.f32 %v1042, 0.6931472
        %v1044 = vmul.f32 -0.5, %v768
        %v1045 = vadd.f32 %v1044, 1.0
        %v1046 = vmul.f32 %v1045, %v768
        %v1047 = vand.u32 2147483647, %v768
        %vm1048 = vcmp.lt.f32.partialorder %v1047, 0.0004427343
        %v1049 = vsel %vm1048, %v1046, %v1043
        %v1050 = vadd.f32 %v770, 1.0
        %v1051 = vlog2.pop %v1050
        %v1052 = vmul.f32 %v1051, 0.6931472
        %v1053 = vmul.f32 -0.5, %v770
        %v1054 = vadd.f32 %v1053, 1.0
        %v1055 = vmul.f32 %v1054, %v770
        %v1056 = vand.u32 2147483647, %v770
        %vm1057 = vcmp.lt.f32.partialorder %v1056, 0.0004427343
        %v1058 = vsel %vm1057, %v1055, %v1052
        %v1059 = vadd.f32 %v611, %v779
        %v1060 = vadd.f32 %v612, %v788
        %v1061 = vadd.f32 %v613, %v797
        %v1062 = vadd.f32 %v614, %v806
        %v1063 = vadd.f32 %v615, %v815
        %v1064 = vadd.f32 %v616, %v824
        %v1065 = vadd.f32 %v617, %v833
        %v1066 = vadd.f32 %v618, %v842
        %v1067 = vadd.f32 %v619, %v851
        %v1068 = vadd.f32 %v620, %v860
        %v1069 = vadd.f32 %v621, %v869
        %v1070 = vadd.f32 %v622, %v878
        %v1071 = vadd.f32 %v623, %v887
        %v1072 = vadd.f32 %v624, %v896
        %v1073 = vadd.f32 %v625, %v905
        %v1074 = vadd.f32 %v626, %v914
        %v1075 = vadd.f32 %v627, %v923
        %v1076 = vadd.f32 %v628, %v932
        %v1077 = vadd.f32 %v629, %v941
        %v1078 = vadd.f32 %v630, %v950
        %v1079 = vadd.f32 %v631, %v959
        %v1080 = vadd.f32 %v632, %v968
        %v1081 = vadd.f32 %v633, %v977
        %v1082 = vadd.f32 %v634, %v986
        %v1083 = vadd.f32 %v635, %v995
        %v1084 = vadd.f32 %v636, %v1004
        %v1085 = vadd.f32 %v637, %v1013
        %v1086 = vadd.f32 %v638, %v1022
        %v1087 = vadd.f32 %v639, %v1031
        %v1088 = vadd.f32 %v640, %v1040
        %v1089 = vadd.f32 %v641, %v1049
        %v1090 = vadd.f32 %v642, %v1058
        %v1091 = vadd.f32 %v1059, 1e-06
        %v1092 = vadd.f32 %v1060, 1e-06
        %v1093 = vadd.f32 %v1061, 1e-06
        %v1094 = vadd.f32 %v1062, 1e-06
        %v1095 = vadd.f32 %v1063, 1e-06
        %v1096 = vadd.f32 %v1064, 1e-06
        %v1097 = vadd.f32 %v1065, 1e-06
        %v1098 = vadd.f32 %v1066, 1e-06
        %v1099 = vadd.f32 %v1067, 1e-06
        %v1100 = vadd.f32 %v1068, 1e-06
        %v1101 = vadd.f32 %v1069, 1e-06
        %v1102 = vadd.f32 %v1070, 1e-06
        %v1103 = vadd.f32 %v1071, 1e-06
        %v1104 = vadd.f32 %v1072, 1e-06
        %v1105 = vadd.f32 %v1073, 1e-06
        %v1106 = vadd.f32 %v1074, 1e-06
        %v1107 = vadd.f32 %v1075, 1e-06
        %v1108 = vadd.f32 %v1076, 1e-06
        %v1109 = vadd.f32 %v1077, 1e-06
        %v1110 = vadd.f32 %v1078, 1e-06
        %v1111 = vadd.f32 %v1079, 1e-06
        %v1112 = vadd.f32 %v1080, 1e-06
        %v1113 = vadd.f32 %v1081, 1e-06
        %v1114 = vadd.f32 %v1082, 1e-06
        %v1115 = vadd.f32 %v1083, 1e-06
        %v1116 = vadd.f32 %v1084, 1e-06
        %v1117 = vadd.f32 %v1085, 1e-06
        %v1118 = vadd.f32 %v1086, 1e-06
        %v1119 = vadd.f32 %v1087, 1e-06
        %v1120 = vadd.f32 %v1088, 1e-06
        %v1121 = vadd.f32 %v1089, 1e-06
        %v1122 = vadd.f32 %v1090, 1e-06
        %v1123 = vld [vmem:[%s465] sm:$0xff]
        %v1124 = vld [vmem:[%s465 + $0x8] sm:$0xff]
        %v1125 = vld [vmem:[%s465 + $0x10] sm:$0xff]
        %v1126 = vld [vmem:[%s465 + $0x18] sm:$0xff]
        %v1127 = vld [vmem:[%s465 + $0x20] sm:$0xff]
        %v1128 = vld [vmem:[%s465 + $0x28] sm:$0xff]
        %v1129 = vld [vmem:[%s465 + $0x30] sm:$0xff]
        %v1130 = vld [vmem:[%s465 + $0x38] sm:$0xff]
        %v1131 = vld [vmem:[%s465 + $0x40] sm:$0xff]
        %v1132 = vld [vmem:[%s465 + $0x48] sm:$0xff]
        %v1133 = vld [vmem:[%s465 + $0x50] sm:$0xff]
        %v1134 = vld [vmem:[%s465 + $0x58] sm:$0xff]
        %v1135 = vld [vmem:[%s465 + $0x60] sm:$0xff]
        %v1136 = vld [vmem:[%s465 + $0x68] sm:$0xff]
        %v1137 = vld [vmem:[%s465 + $0x70] sm:$0xff]
        %v1138 = vld [vmem:[%s465 + $0x78] sm:$0xff]
        %v1139 = vld [vmem:[%s465 + $0x80] sm:$0xff]
        %v1140 = vld [vmem:[%s465 + $0x88] sm:$0xff]
        %v1141 = vld [vmem:[%s465 + $0x90] sm:$0xff]
        %v1142 = vld [vmem:[%s465 + $0x98] sm:$0xff]
        %v1143 = vld [vmem:[%s465 + $0xa0] sm:$0xff]
        %v1144 = vld [vmem:[%s465 + $0xa8] sm:$0xff]
        %v1145 = vld [vmem:[%s465 + $0xb0] sm:$0xff]
        %v1146 = vld [vmem:[%s465 + $0xb8] sm:$0xff]
        %v1147 = vld [vmem:[%s465 + $0xc0] sm:$0xff]
        %v1148 = vld [vmem:[%s465 + $0xc8] sm:$0xff]
        %v1149 = vld [vmem:[%s465 + $0xd0] sm:$0xff]
        %v1150 = vld [vmem:[%s465 + $0xd8] sm:$0xff]
        %v1151 = vld [vmem:[%s465 + $0xe0] sm:$0xff]
        %v1152 = vld [vmem:[%s465 + $0xe8] sm:$0xff]
        %v1153 = vld [vmem:[%s465 + $0xf0] sm:$0xff]
        %v1154 = vld [vmem:[%s465 + $0xf8] sm:$0xff]
        %v1155 = vmul.f32 %v1123, %v1091
        %v1156 = vmul.f32 %v1124, %v1092
        %v1157 = vmul.f32 %v1125, %v1093
        %v1158 = vmul.f32 %v1126, %v1094
        %v1159 = vmul.f32 %v1127, %v1095
        %v1160 = vmul.f32 %v1128, %v1096
        %v1161 = vmul.f32 %v1129, %v1097
        %v1162 = vmul.f32 %v1130, %v1098
        %v1163 = vmul.f32 %v1131, %v1099
        %v1164 = vmul.f32 %v1132, %v1100
        %v1165 = vmul.f32 %v1133, %v1101
        %v1166 = vmul.f32 %v1134, %v1102
        %v1167 = vmul.f32 %v1135, %v1103
        %v1168 = vmul.f32 %v1136, %v1104
        %v1169 = vmul.f32 %v1137, %v1105
        %v1170 = vmul.f32 %v1138, %v1106
        %v1171 = vmul.f32 %v1139, %v1107
        %v1172 = vmul.f32 %v1140, %v1108
        %v1173 = vmul.f32 %v1141, %v1109
        %v1174 = vmul.f32 %v1142, %v1110
        %v1175 = vmul.f32 %v1143, %v1111
        %v1176 = vmul.f32 %v1144, %v1112
        %v1177 = vmul.f32 %v1145, %v1113
        %v1178 = vmul.f32 %v1146, %v1114
        %v1179 = vmul.f32 %v1147, %v1115
        %v1180 = vmul.f32 %v1148, %v1116
        %v1181 = vmul.f32 %v1149, %v1117
        %v1182 = vmul.f32 %v1150, %v1118
        %v1183 = vmul.f32 %v1151, %v1119
        %v1184 = vmul.f32 %v1152, %v1120
        %v1185 = vmul.f32 %v1153, %v1121
        %v1186 = vmul.f32 %v1154, %v1122
        %v1187 = vadd.f32 %v547, %v1155
        %v1188 = vadd.f32 %v548, %v1156
        %v1189 = vadd.f32 %v549, %v1157
        %v1190 = vadd.f32 %v550, %v1158
        %v1191 = vadd.f32 %v551, %v1159
        %v1192 = vadd.f32 %v552, %v1160
        %v1193 = vadd.f32 %v553, %v1161
        %v1194 = vadd.f32 %v554, %v1162
        %v1195 = vadd.f32 %v555, %v1163
        %v1196 = vadd.f32 %v556, %v1164
        %v1197 = vadd.f32 %v557, %v1165
        %v1198 = vadd.f32 %v558, %v1166
        %v1199 = vadd.f32 %v559, %v1167
        %v1200 = vadd.f32 %v560, %v1168
        %v1201 = vadd.f32 %v561, %v1169
        %v1202 = vadd.f32 %v562, %v1170
        %v1203 = vadd.f32 %v563, %v1171
        %v1204 = vadd.f32 %v564, %v1172
        %v1205 = vadd.f32 %v565, %v1173
        %v1206 = vadd.f32 %v566, %v1174
        %v1207 = vadd.f32 %v567, %v1175
        %v1208 = vadd.f32 %v568, %v1176
        %v1209 = vadd.f32 %v569, %v1177
        %v1210 = vadd.f32 %v570, %v1178
        %v1211 = vadd.f32 %v571, %v1179
        %v1212 = vadd.f32 %v572, %v1180
        %v1213 = vadd.f32 %v573, %v1181
        %v1214 = vadd.f32 %v574, %v1182
        %v1215 = vadd.f32 %v575, %v1183
        %v1216 = vadd.f32 %v576, %v1184
        %v1217 = vadd.f32 %v577, %v1185
        %v1218 = vadd.f32 %v578, %v1186
        %p1219 = scmp.eq.s32.totalorder %s40, 0
        // Predicated region
        $region69: #{tpu_custom_call.1} parent=47 // pred_check
          %p1220 = pneg %p1219
        $region70: #{tpu_custom_call.1} parent=47 // pred_check_branch
          %1222 = sbr.rel (%p1220) target = $region72
        $region71: #{tpu_custom_call.1} parent=47 // pred_region
          %1223 = vst [vmem:[#allocation2] sm:$0xff] 0.0
          %1224 = vst [vmem:[#allocation2 + $0x8] sm:$0xff] 0.0
          %v1225 = vld [vmem:[%s543] sm:$0x1]
          %v1226 = vld [vmem:[%s546] sm:$0x1]
          %v1227 = vmax.f32 %v1226, 0.0
          %v1228 = vand.u32 2147483647, %v1226
          %v1229 = vsub.f32 0.0, %v1228
          %v1230 = vmul.f32 %v1229, 1.442695
          %v1231 = vpow.pop %v1230
          %v1232 = vadd.f32 %v1231, 1.0
          %v1233 = vlog2.pop %v1232
          %v1234 = vmul.f32 %v1233, 0.6931472
          %v1235 = vmul.f32 -0.5, %v1231
          %v1236 = vadd.f32 %v1235, 1.0
          %v1237 = vmul.f32 %v1236, %v1231
          %v1238 = vand.u32 2147483647, %v1231
          %vm1239 = vcmp.lt.f32.partialorder %v1238, 0.0004427343
          %v1240 = vsel %vm1239, %v1237, %v1234
          %v1241 = vadd.f32 %v1227, %v1240
          %v1242 = vadd.f32 %v1241, 1e-06
          %v1243 = vlog2.pop %v1242
          %v1244 = vmul.f32 %v1243, 0.6931472
          %v1245 = vsub.f32 0.0, %v1244
          %v1246 = vmul.f32 %v1242, %v1242
          %v1247 = vmul.f32 %v1225, %v1225
          %v1248 = vadd.f32 %v1246, %v1247
          %v1249 = vsub.f32 %v1248, 1.0
          %v1250 = vmul.f32 %v1249, 0.5
          %v1251 = vadd.f32 %v1245, %v1250
          %1252 = vst [vmem:[%s536] sm:$0x1] %v1251
        $region72: #{tpu_custom_call.1} parent=47 // pred_fallthru
          _
        %v1253 = vld [vmem:[#allocation2] sm:$0xff]
        %v1254 = vld [vmem:[#allocation2 + $0x8] sm:$0xff]
        %v1255 = vld [vmem:[%s435] sm:$0xff]
        %v1256 = vld [vmem:[%s435 + $0x8] sm:$0xff]
        %v1257 = vld [vmem:[%s435 + $0x10] sm:$0xff]
        %v1258 = vld [vmem:[%s435 + $0x18] sm:$0xff]
        %1259 = vmatpush.msra.mxu0 %v1202
        %1260 = vmatpush.msra.mxu0 %v1201
        %1261 = vmatpush.msra.mxu0 %v1200
        %1262 = vmatpush.msra.mxu0 %v1199
        %1263 = vmatpush.msra.mxu0 %v1198
        %1264 = vmatpush.msra.mxu0 %v1197
        %1265 = vmatpush.msra.mxu0 %v1196
        %1266 = vmatpush.msra.mxu0 %v1195
        %1267 = vmatpush.msra.mxu0 %v1194
        %1268 = vmatpush.msra.mxu0 %v1193
        %1269 = vmatpush.msra.mxu0 %v1192
        %1270 = vmatpush.msra.mxu0 %v1191
        %1271 = vmatpush.msra.mxu0 %v1190
        %1272 = vmatpush.msra.mxu0 %v1189
        %1273 = vmatpush.msra.mxu0 %v1188
        %1274 = vmatpush.msra.mxu0 %v1187
        %1275 = vmatmul.f32.gmra.mxu0 %v1255
        %v1276 = vpop.f32.mrf.mxu0
        %v1277 = vadd.f32 0.0, %v1276
        %1278 = vmatmul.f32.gmra.mxu0 %v1257
        %v1279 = vpop.f32.mrf.mxu0
        %v1280 = vadd.f32 0.0, %v1279
        %1281 = vdwg.mxu0
        %1282 = vmatpush.msra.mxu0 %v1218
        %1283 = vmatpush.msra.mxu0 %v1217
        %1284 = vmatpush.msra.mxu0 %v1216
        %1285 = vmatpush.msra.mxu0 %v1215
        %1286 = vmatpush.msra.mxu0 %v1214
        %1287 = vmatpush.msra.mxu0 %v1213
        %1288 = vmatpush.msra.mxu0 %v1212
        %1289 = vmatpush.msra.mxu0 %v1211
        %1290 = vmatpush.msra.mxu0 %v1210
        %1291 = vmatpush.msra.mxu0 %v1209
        %1292 = vmatpush.msra.mxu0 %v1208
        %1293 = vmatpush.msra.mxu0 %v1207
        %1294 = vmatpush.msra.mxu0 %v1206
        %1295 = vmatpush.msra.mxu0 %v1205
        %1296 = vmatpush.msra.mxu0 %v1204
        %1297 = vmatpush.msra.mxu0 %v1203
        %1298 = vmatmul.f32.gmra.mxu0 %v1256
        %v1299 = vpop.f32.mrf.mxu0
        %v1300 = vadd.f32 %v1277, %v1299
        %1301 = vmatmul.f32.gmra.mxu0 %v1258
        %v1302 = vpop.f32.mrf.mxu0
        %v1303 = vadd.f32 %v1280, %v1302
        %1304 = vdwg.mxu0
        %v1305 = vadd.f32 %v1253, %v1300
        %v1306 = vadd.f32 %v1254, %v1303
        %1307 = vst [vmem:[#allocation2] sm:$0xff] %v1305
        %1308 = vst [vmem:[#allocation2 + $0x8] sm:$0xff] %v1306
        %v1309 = vld [vmem:[%s536] sm:$0x1]
        %v1310 = vlog2.pop %v1091
        %v1311 = vmul.f32 %v1310, 0.6931472
        %v1312 = vlog2.pop %v1092
        %v1313 = vmul.f32 %v1312, 0.6931472
        %v1314 = vlog2.pop %v1093
        %v1315 = vmul.f32 %v1314, 0.6931472
        %v1316 = vlog2.pop %v1094
        %v1317 = vmul.f32 %v1316, 0.6931472
        %v1318 = vlog2.pop %v1095
        %v1319 = vmul.f32 %v1318, 0.6931472
        %v1320 = vlog2.pop %v1096
        %v1321 = vmul.f32 %v1320, 0.6931472
        %v1322 = vlog2.pop %v1097
        %v1323 = vmul.f32 %v1322, 0.6931472
        %v1324 = vlog2.pop %v1098
        %v1325 = vmul.f32 %v1324, 0.6931472
        %v1326 = vlog2.pop %v1099
        %v1327 = vmul.f32 %v1326, 0.6931472
        %v1328 = vlog2.pop %v1100
        %v1329 = vmul.f32 %v1328, 0.6931472
        %v1330 = vlog2.pop %v1101
        %v1331 = vmul.f32 %v1330, 0.6931472
        %v1332 = vlog2.pop %v1102
        %v1333 = vmul.f32 %v1332, 0.6931472
        %v1334 = vlog2.pop %v1103
        %v1335 = vmul.f32 %v1334, 0.6931472
        %v1336 = vlog2.pop %v1104
        %v1337 = vmul.f32 %v1336, 0.6931472
        %v1338 = vlog2.pop %v1105
        %v1339 = vmul.f32 %v1338, 0.6931472
        %v1340 = vlog2.pop %v1106
        %v1341 = vmul.f32 %v1340, 0.6931472
        %v1342 = vlog2.pop %v1107
        %v1343 = vmul.f32 %v1342, 0.6931472
        %v1344 = vlog2.pop %v1108
        %v1345 = vmul.f32 %v1344, 0.6931472
        %v1346 = vlog2.pop %v1109
        %v1347 = vmul.f32 %v1346, 0.6931472
        %v1348 = vlog2.pop %v1110
        %v1349 = vmul.f32 %v1348, 0.6931472
        %v1350 = vlog2.pop %v1111
        %v1351 = vmul.f32 %v1350, 0.6931472
        %v1352 = vlog2.pop %v1112
        %v1353 = vmul.f32 %v1352, 0.6931472
        %v1354 = vlog2.pop %v1113
        %v1355 = vmul.f32 %v1354, 0.6931472
        %v1356 = vlog2.pop %v1114
        %v1357 = vmul.f32 %v1356, 0.6931472
        %v1358 = vlog2.pop %v1115
        %v1359 = vmul.f32 %v1358, 0.6931472
        %v1360 = vlog2.pop %v1116
        %v1361 = vmul.f32 %v1360, 0.6931472
        %v1362 = vlog2.pop %v1117
        %v1363 = vmul.f32 %v1362, 0.6931472
        %v1364 = vlog2.pop %v1118
        %v1365 = vmul.f32 %v1364, 0.6931472
        %v1366 = vlog2.pop %v1119
        %v1367 = vmul.f32 %v1366, 0.6931472
        %v1368 = vlog2.pop %v1120
        %v1369 = vmul.f32 %v1368, 0.6931472
        %v1370 = vlog2.pop %v1121
        %v1371 = vmul.f32 %v1370, 0.6931472
        %v1372 = vlog2.pop %v1122
        %v1373 = vmul.f32 %v1372, 0.6931472
        %v1374 = vsub.f32 0.0, %v1311
        %v1375 = vsub.f32 0.0, %v1313
        %v1376 = vsub.f32 0.0, %v1315
        %v1377 = vsub.f32 0.0, %v1317
        %v1378 = vsub.f32 0.0, %v1319
        %v1379 = vsub.f32 0.0, %v1321
        %v1380 = vsub.f32 0.0, %v1323
        %v1381 = vsub.f32 0.0, %v1325
        %v1382 = vsub.f32 0.0, %v1327
        %v1383 = vsub.f32 0.0, %v1329
        %v1384 = vsub.f32 0.0, %v1331
        %v1385 = vsub.f32 0.0, %v1333
        %v1386 = vsub.f32 0.0, %v1335
        %v1387 = vsub.f32 0.0, %v1337
        %v1388 = vsub.f32 0.0, %v1339
        %v1389 = vsub.f32 0.0, %v1341
        %v1390 = vsub.f32 0.0, %v1343
        %v1391 = vsub.f32 0.0, %v1345
        %v1392 = vsub.f32 0.0, %v1347
        %v1393 = vsub.f32 0.0, %v1349
        %v1394 = vsub.f32 0.0, %v1351
        %v1395 = vsub.f32 0.0, %v1353
        %v1396 = vsub.f32 0.0, %v1355
        %v1397 = vsub.f32 0.0, %v1357
        %v1398 = vsub.f32 0.0, %v1359
        %v1399 = vsub.f32 0.0, %v1361
        %v1400 = vsub.f32 0.0, %v1363
        %v1401 = vsub.f32 0.0, %v1365
        %v1402 = vsub.f32 0.0, %v1367
        %v1403 = vsub.f32 0.0, %v1369
        %v1404 = vsub.f32 0.0, %v1371
        %v1405 = vsub.f32 0.0, %v1373
        %v1406 = vmul.f32 %v1091, %v1091
        %v1407 = vmul.f32 %v1092, %v1092
        %v1408 = vmul.f32 %v1093, %v1093
        %v1409 = vmul.f32 %v1094, %v1094
        %v1410 = vmul.f32 %v1095, %v1095
        %v1411 = vmul.f32 %v1096, %v1096
        %v1412 = vmul.f32 %v1097, %v1097
        %v1413 = vmul.f32 %v1098, %v1098
        %v1414 = vmul.f32 %v1099, %v1099
        %v1415 = vmul.f32 %v1100, %v1100
        %v1416 = vmul.f32 %v1101, %v1101
        %v1417 = vmul.f32 %v1102, %v1102
        %v1418 = vmul.f32 %v1103, %v1103
        %v1419 = vmul.f32 %v1104, %v1104
        %v1420 = vmul.f32 %v1105, %v1105
        %v1421 = vmul.f32 %v1106, %v1106
        %v1422 = vmul.f32 %v1107, %v1107
        %v1423 = vmul.f32 %v1108, %v1108
        %v1424 = vmul.f32 %v1109, %v1109
        %v1425 = vmul.f32 %v1110, %v1110
        %v1426 = vmul.f32 %v1111, %v1111
        %v1427 = vmul.f32 %v1112, %v1112
        %v1428 = vmul.f32 %v1113, %v1113
        %v1429 = vmul.f32 %v1114, %v1114
        %v1430 = vmul.f32 %v1115, %v1115
        %v1431 = vmul.f32 %v1116, %v1116
        %v1432 = vmul.f32 %v1117, %v1117
        %v1433 = vmul.f32 %v1118, %v1118
        %v1434 = vmul.f32 %v1119, %v1119
        %v1435 = vmul.f32 %v1120, %v1120
        %v1436 = vmul.f32 %v1121, %v1121
        %v1437 = vmul.f32 %v1122, %v1122
        %v1438 = vmul.f32 %v547, %v547
        %v1439 = vmul.f32 %v548, %v548
        %v1440 = vmul.f32 %v549, %v549
        %v1441 = vmul.f32 %v550, %v550
        %v1442 = vmul.f32 %v551, %v551
        %v1443 = vmul.f32 %v552, %v552
        %v1444 = vmul.f32 %v553, %v553
        %v1445 = vmul.f32 %v554, %v554
        %v1446 = vmul.f32 %v555, %v555
        %v1447 = vmul.f32 %v556, %v556
        %v1448 = vmul.f32 %v557, %v557
        %v1449 = vmul.f32 %v558, %v558
        %v1450 = vmul.f32 %v559, %v559
        %v1451 = vmul.f32 %v560, %v560
        %v1452 = vmul.f32 %v561, %v561
        %v1453 = vmul.f32 %v562, %v562
        %v1454 = vmul.f32 %v563, %v563
        %v1455 = vmul.f32 %v564, %v564
        %v1456 = vmul.f32 %v565, %v565
        %v1457 = vmul.f32 %v566, %v566
        %v1458 = vmul.f32 %v567, %v567
        %v1459 = vmul.f32 %v568, %v568
        %v1460 = vmul.f32 %v569, %v569
        %v1461 = vmul.f32 %v570, %v570
        %v1462 = vmul.f32 %v571, %v571
        %v1463 = vmul.f32 %v572, %v572
        %v1464 = vmul.f32 %v573, %v573
        %v1465 = vmul.f32 %v574, %v574
        %v1466 = vmul.f32 %v575, %v575
        %v1467 = vmul.f32 %v576, %v576
        %v1468 = vmul.f32 %v577, %v577
        %v1469 = vmul.f32 %v578, %v578
        %v1470 = vadd.f32 %v1406, %v1438
        %v1471 = vadd.f32 %v1407, %v1439
        %v1472 = vadd.f32 %v1408, %v1440
        %v1473 = vadd.f32 %v1409, %v1441
        %v1474 = vadd.f32 %v1410, %v1442
        %v1475 = vadd.f32 %v1411, %v1443
        %v1476 = vadd.f32 %v1412, %v1444
        %v1477 = vadd.f32 %v1413, %v1445
        %v1478 = vadd.f32 %v1414, %v1446
        %v1479 = vadd.f32 %v1415, %v1447
        %v1480 = vadd.f32 %v1416, %v1448
        %v1481 = vadd.f32 %v1417, %v1449
        %v1482 = vadd.f32 %v1418, %v1450
        %v1483 = vadd.f32 %v1419, %v1451
        %v1484 = vadd.f32 %v1420, %v1452
        %v1485 = vadd.f32 %v1421, %v1453
        %v1486 = vadd.f32 %v1422, %v1454
        %v1487 = vadd.f32 %v1423, %v1455
        %v1488 = vadd.f32 %v1424, %v1456
        %v1489 = vadd.f32 %v1425, %v1457
        %v1490 = vadd.f32 %v1426, %v1458
        %v1491 = vadd.f32 %v1427, %v1459
        %v1492 = vadd.f32 %v1428, %v1460
        %v1493 = vadd.f32 %v1429, %v1461
        %v1494 = vadd.f32 %v1430, %v1462
        %v1495 = vadd.f32 %v1431, %v1463
        %v1496 = vadd.f32 %v1432, %v1464
        %v1497 = vadd.f32 %v1433, %v1465
        %v1498 = vadd.f32 %v1434, %v1466
        %v1499 = vadd.f32 %v1435, %v1467
        %v1500 = vadd.f32 %v1436, %v1468
        %v1501 = vadd.f32 %v1437, %v1469
        %v1502 = vsub.f32 %v1470, 1.0
        %v1503 = vsub.f32 %v1471, 1.0
        %v1504 = vsub.f32 %v1472, 1.0
        %v1505 = vsub.f32 %v1473, 1.0
        %v1506 = vsub.f32 %v1474, 1.0
        %v1507 = vsub.f32 %v1475, 1.0
        %v1508 = vsub.f32 %v1476, 1.0
        %v1509 = vsub.f32 %v1477, 1.0
        %v1510 = vsub.f32 %v1478, 1.0
        %v1511 = vsub.f32 %v1479, 1.0
        %v1512 = vsub.f32 %v1480, 1.0
        %v1513 = vsub.f32 %v1481, 1.0
        %v1514 = vsub.f32 %v1482, 1.0
        %v1515 = vsub.f32 %v1483, 1.0
        %v1516 = vsub.f32 %v1484, 1.0
        %v1517 = vsub.f32 %v1485, 1.0
        %v1518 = vsub.f32 %v1486, 1.0
        %v1519 = vsub.f32 %v1487, 1.0
        %v1520 = vsub.f32 %v1488, 1.0
        %v1521 = vsub.f32 %v1489, 1.0
        %v1522 = vsub.f32 %v1490, 1.0
        %v1523 = vsub.f32 %v1491, 1.0
        %v1524 = vsub.f32 %v1492, 1.0
        %v1525 = vsub.f32 %v1493, 1.0
        %v1526 = vsub.f32 %v1494, 1.0
        %v1527 = vsub.f32 %v1495, 1.0
        %v1528 = vsub.f32 %v1496, 1.0
        %v1529 = vsub.f32 %v1497, 1.0
        %v1530 = vsub.f32 %v1498, 1.0
        %v1531 = vsub.f32 %v1499, 1.0
        %v1532 = vsub.f32 %v1500, 1.0
        %v1533 = vsub.f32 %v1501, 1.0
        %v1534 = vmul.f32 %v1502, 0.5
        %v1535 = vmul.f32 %v1503, 0.5
        %v1536 = vmul.f32 %v1504, 0.5
        %v1537 = vmul.f32 %v1505, 0.5
        %v1538 = vmul.f32 %v1506, 0.5
        %v1539 = vmul.f32 %v1507, 0.5
        %v1540 = vmul.f32 %v1508, 0.5
        %v1541 = vmul.f32 %v1509, 0.5
        %v1542 = vmul.f32 %v1510, 0.5
        %v1543 = vmul.f32 %v1511, 0.5
        %v1544 = vmul.f32 %v1512, 0.5
        %v1545 = vmul.f32 %v1513, 0.5
        %v1546 = vmul.f32 %v1514, 0.5
        %v1547 = vmul.f32 %v1515, 0.5
        %v1548 = vmul.f32 %v1516, 0.5
        %v1549 = vmul.f32 %v1517, 0.5
        %v1550 = vmul.f32 %v1518, 0.5
        %v1551 = vmul.f32 %v1519, 0.5
        %v1552 = vmul.f32 %v1520, 0.5
        %v1553 = vmul.f32 %v1521, 0.5
        %v1554 = vmul.f32 %v1522, 0.5
        %v1555 = vmul.f32 %v1523, 0.5
        %v1556 = vmul.f32 %v1524, 0.5
        %v1557 = vmul.f32 %v1525, 0.5
        %v1558 = vmul.f32 %v1526, 0.5
        %v1559 = vmul.f32 %v1527, 0.5
        %v1560 = vmul.f32 %v1528, 0.5
        %v1561 = vmul.f32 %v1529, 0.5
        %v1562 = vmul.f32 %v1530, 0.5
        %v1563 = vmul.f32 %v1531, 0.5
        %v1564 = vmul.f32 %v1532, 0.5
        %v1565 = vmul.f32 %v1533, 0.5
        %v1566 = vadd.f32 %v1374, %v1534
        %v1567 = vadd.f32 %v1375, %v1535
        %v1568 = vadd.f32 %v1376, %v1536
        %v1569 = vadd.f32 %v1377, %v1537
        %v1570 = vadd.f32 %v1378, %v1538
        %v1571 = vadd.f32 %v1379, %v1539
        %v1572 = vadd.f32 %v1380, %v1540
        %v1573 = vadd.f32 %v1381, %v1541
        %v1574 = vadd.f32 %v1382, %v1542
        %v1575 = vadd.f32 %v1383, %v1543
        %v1576 = vadd.f32 %v1384, %v1544
        %v1577 = vadd.f32 %v1385, %v1545
        %v1578 = vadd.f32 %v1386, %v1546
        %v1579 = vadd.f32 %v1387, %v1547
        %v1580 = vadd.f32 %v1388, %v1548
        %v1581 = vadd.f32 %v1389, %v1549
        %v1582 = vadd.f32 %v1390, %v1550
        %v1583 = vadd.f32 %v1391, %v1551
        %v1584 = vadd.f32 %v1392, %v1552
        %v1585 = vadd.f32 %v1393, %v1553
        %v1586 = vadd.f32 %v1394, %v1554
        %v1587 = vadd.f32 %v1395, %v1555
        %v1588 = vadd.f32 %v1396, %v1556
        %v1589 = vadd.f32 %v1397, %v1557
        %v1590 = vadd.f32 %v1398, %v1558
        %v1591 = vadd.f32 %v1399, %v1559
        %v1592 = vadd.f32 %v1400, %v1560
        %v1593 = vadd.f32 %v1401, %v1561
        %v1594 = vadd.f32 %v1402, %v1562
        %v1595 = vadd.f32 %v1403, %v1563
        %v1596 = vadd.f32 %v1404, %v1564
        %v1597 = vadd.f32 %v1405, %v1565
        %v1598 = vadd.f32 %v1566, %v1567
        %v1599 = vadd.f32 %v1598, %v1568
        %v1600 = vadd.f32 %v1599, %v1569
        %v1601 = vadd.f32 %v1600, %v1570
        %v1602 = vadd.f32 %v1601, %v1571
        %v1603 = vadd.f32 %v1602, %v1572
        %v1604 = vadd.f32 %v1603, %v1573
        %v1605 = vadd.f32 %v1604, %v1574
        %v1606 = vadd.f32 %v1605, %v1575
        %v1607 = vadd.f32 %v1606, %v1576
        %v1608 = vadd.f32 %v1607, %v1577
        %v1609 = vadd.f32 %v1608, %v1578
        %v1610 = vadd.f32 %v1609, %v1579
        %v1611 = vadd.f32 %v1610, %v1580
        %v1612 = vadd.f32 %v1611, %v1581
        %v1613 = vadd.f32 %v1612, %v1582
        %v1614 = vadd.f32 %v1613, %v1583
        %v1615 = vadd.f32 %v1614, %v1584
        %v1616 = vadd.f32 %v1615, %v1585
        %v1617 = vadd.f32 %v1616, %v1586
        %v1618 = vadd.f32 %v1617, %v1587
        %v1619 = vadd.f32 %v1618, %v1588
        %v1620 = vadd.f32 %v1619, %v1589
        %v1621 = vadd.f32 %v1620, %v1590
        %v1622 = vadd.f32 %v1621, %v1591
        %v1623 = vadd.f32 %v1622, %v1592
        %v1624 = vadd.f32 %v1623, %v1593
        %v1625 = vadd.f32 %v1624, %v1594
        %v1626 = vadd.f32 %v1625, %v1595
        %v1627 = vadd.f32 %v1626, %v1596
        %v1628 = vadd.f32 %v1627, %v1597
        %v1629 = vrot.slane %v1628, 4
        %v1630 = vadd.f32 %v1628, %v1629
        %v1631 = vrot.slane %v1630, 2
        %v1632 = vadd.f32 %v1630, %v1631
        %v1633 = vrot.slane %v1632, 1
        %v1634 = vadd.f32 %v1632, %v1633
        %v1635 = vadd.f32 %v1309, %v1634
        %1636 = vst [vmem:[%s536] sm:$0x1] %v1635
        %p1637 = scmp.eq.s32.totalorder %s40, 1
        // Predicated region
        $region73: #{tpu_custom_call.1} parent=47 // pred_check
          %p1638 = pneg %p1637
        $region74: #{tpu_custom_call.1} parent=47 // pred_check_branch
          %1640 = sbr.rel (%p1638) target = $region76
        $region75: #{tpu_custom_call.1} parent=47 // pred_region
          %v1641 = vld [vmem:[%s543] sm:$0x1]
          %v1642 = vld [vmem:[%s546] sm:$0x1]
          %v1643 = vmax.f32 %v1642, 0.0
          %v1644 = vand.u32 2147483647, %v1642
          %v1645 = vsub.f32 0.0, %v1644
          %v1646 = vmul.f32 %v1645, 1.442695
          %v1647 = vpow.pop %v1646
          %v1648 = vadd.f32 %v1647, 1.0
          %v1649 = vlog2.pop %v1648
          %v1650 = vmul.f32 %v1649, 0.6931472
          %v1651 = vmul.f32 -0.5, %v1647
          %v1652 = vadd.f32 %v1651, 1.0
          %v1653 = vmul.f32 %v1652, %v1647
          %v1654 = vand.u32 2147483647, %v1647
          %vm1655 = vcmp.lt.f32.partialorder %v1654, 0.0004427343
          %v1656 = vsel %vm1655, %v1653, %v1650
          %v1657 = vadd.f32 %v1643, %v1656
          %v1658 = vadd.f32 %v1657, 1e-06
          %v1659 = vld [vmem:[%s474] sm:$0x1]
          %v1660 = vmul.f32 %v1659, %v1658
          %v1661 = vadd.f32 %v1641, %v1660
          %v1662 = vld [vmem:[#allocation2] sm:$0xff]
          %v1663 = vld [vmem:[#allocation2 + $0x8] sm:$0xff]
          %v1665 = vperm.slane %v1661, 0
          %v1667 = vadd.f32 %v1662, %v1665
          %v1668 = vadd.f32 %v1663, %v1665
          %1669 = vst [vmem:[%s530] sm:$0xff] %v1667
          %1670 = vst [vmem:[%s530 + $0x8] sm:$0xff] %v1668
        $region76: #{tpu_custom_call.1} parent=47 // pred_fallthru
          _
        %s1671 = sand.u32 %s243, 1
        %s1672 = scalar_lea.sflag [#allocation5], %s1671
        %s1673 = sand.u32 %s243, 1
        %s1674 = smul.addr %s1673, 16
        %s1675 = scalar_lea.vmem [#allocation12], %s1674
        %s1676 = sand.u32 %s269, 1
        %s1677 = scalar_lea.sflag [#allocation14], %s1676
        %s1678 = sand.u32 %s269, 1
        %s1679 = scalar_lea.vmem [#allocation13], %s1678
        // Predicated region
        $region77: #{tpu_custom_call.1} parent=47 // pred_check
          %p1680 = pneg %p253
        $region78: #{tpu_custom_call.1} parent=47 // pred_check_branch
          %1682 = sbr.rel (%p1680) target = $region80
        $region79: #{tpu_custom_call.1} parent=47 // pred_region
          %1684 = vsyncadd %s1672, 0
          %s1685 = smul.addr %s39, 8
          %s1686 = scalar_lea.hbm %s7, %s1685
          %s1687 = sshll.u32 %s1675, 4
          %s1688 = int_to_ptr.vmem [resolvable:$true] %s1687
          %s1689 = sshll.u32 %s1686, 4
          %s1690 = int_to_ptr.hbm [resolvable:$true] %s1689
          %1695 = dma.vmem_to_hbm [thread:$0]  %s1688, 256, %s1690, %s1672, 128, 256, 8
        $region80: #{tpu_custom_call.1} parent=47 // pred_fallthru
          _
        // Predicated region
        $region81: #{tpu_custom_call.1} parent=47 // pred_check
          %p1696 = pneg %p279
        $region82: #{tpu_custom_call.1} parent=47 // pred_check_branch
          %1698 = sbr.rel (%p1696) target = $region84
        $region83: #{tpu_custom_call.1} parent=47 // pred_region
          %1700 = vsyncadd %s1677, 0
          %s1701 = scalar_lea.hbm %s8, %s39
          %s1703 = sshll.u32 %s1679, 4
          %s1704 = int_to_ptr.vmem [resolvable:$true] %s1703
          %s1705 = sshll.u32 %s1701, 4
          %s1706 = int_to_ptr.hbm [resolvable:$true] %s1705
          %1708 = dma.vmem_to_hbm [thread:$0]  %s1704, 16, %s1706, %s1677
        $region84: #{tpu_custom_call.1} parent=47 // pred_fallthru
          _
      $region48: #{tpu_custom_call.1} parent=5 // pred_fallthru
        _
      %p1709 = scmp.le.s32.totalorder 2, %s30
      // Predicated region
      $region85: #{tpu_custom_call.1} parent=5 // pred_check
        %p1710 = pneg %p1709
      $region86: #{tpu_custom_call.1} parent=5 // pred_check_branch
        %1712 = sbr.rel (%p1710) target = $region88
      $region87: #{tpu_custom_call.1} parent=5 // pred_region
        %s1713 = ssub.s32 %s30, 2
        // Predicated region
        $region89: #{tpu_custom_call.1} parent=87 // pred_check
          %p1714 = pneg %p259
        $region90: #{tpu_custom_call.1} parent=87 // pred_check_branch
          %1716 = sbr.rel (%p1714) target = $region92
        $region91: #{tpu_custom_call.1} parent=87 // pred_region
          %s1717 = sand.u32 %s244, 1
          %s1718 = scalar_lea.sflag [#allocation5], %s1717
          %s1719 = sand.u32 %s244, 1
          %s1720 = smul.addr %s1719, 16
          %s1721 = scalar_lea.vmem [#allocation12], %s1720
          %1723 = dma.done %s1718, 256
        $region92: #{tpu_custom_call.1} parent=87 // pred_fallthru
          _
        // Predicated region
        $region93: #{tpu_custom_call.1} parent=87 // pred_check
          %p1724 = pneg %p285
        $region94: #{tpu_custom_call.1} parent=87 // pred_check_branch
          %1726 = sbr.rel (%p1724) target = $region96
        $region95: #{tpu_custom_call.1} parent=87 // pred_region
          %s1727 = sand.u32 %s270, 1
          %s1728 = scalar_lea.sflag [#allocation14], %s1727
          %s1729 = sand.u32 %s270, 1
          %s1730 = scalar_lea.vmem [#allocation13], %s1729
          %1732 = dma.done %s1728, 16
        $region96: #{tpu_custom_call.1} parent=87 // pred_fallthru
          _
      $region88: #{tpu_custom_call.1} parent=5 // pred_fallthru
        _
    $region6: #{tpu_custom_call.1} parent=1 // loop_footer
      %s34 = sadd.s32 1, %s30
    $region7: #{tpu_custom_call.1} parent=1 // loop_footer_branch
      %29 = sbr.rel target = $region3
    $region8: #{tpu_custom_call.1} parent=1 // loop_exit
      _
    %1733 = vsyncpa [#allocation4], 1
    %s1734 = scalar_lea.sflag [#allocation4], 1
    %1735 = vsyncpa %s1734, 1
    %1736 = vsyncpa [#allocation7], 1
    %s1737 = scalar_lea.sflag [#allocation7], 1
    %1738 = vsyncpa %s1737, 1
    %1739 = vsyncpa [#allocation10], 1
    %s1740 = scalar_lea.sflag [#allocation10], 1
    %1741 = vsyncpa %s1740, 1
    %1742 = vsyncpa [#allocation5], 1
    %s1743 = scalar_lea.sflag [#allocation5], 1
    %1744 = vsyncpa %s1743, 1
    %1745 = vsyncpa [#allocation14], 1
    %s1746 = scalar_lea.sflag [#allocation14], 1
    %1747 = vsyncpa %s1746, 1

</llo_original>
